<compile_context>
chip_gen: v7x
topology: tpu7x:2x2x1
jax: 0.10.0
libtpu: 0.0.40
codegen_flags: <defaults>
</compile_context>

<pallas_src>
import functools

import jax
import jax.numpy as jnp
from jax.experimental import pallas as pl
from jax.experimental.pallas import tpu as pltpu

DTYPE = jnp.float32

# ----- model dimensions (small, consistent with the module's forward) -----
B = 2            # batch
C, H, W = 4, 16, 16
D_IN = C * H * W # 1024 flattened input features
HID = 32         # encoder / decoder hidden width
LATENT = 8       # latent_dim
PROP_HID = 16    # property_net hidden width
EPS_STD = 1.0    # eps_std
SMALL_W = 128    # lane-dense packed slab: [mu(8) | logvar(8) | prop(1) | pad]


def _vae_kernel(eps_std,
                x_ref, eps_ref,
                we1_ref, be1_ref,
                whead_ref, bhead_ref,     # fused [Wmu | Wlv], [bmu | blv]
                wzh_ref, bzh_ref,         # fused [Wd1 | Wp1], [bd1 | bp1]
                wp2_ref, bp2_ref,
                wd2_ref, bd2_ref,
                recon_ref, small_ref):
    tb = recon_ref.shape[0]

    # ---- encoder: h = relu(x @ We1 + be1) ----
    # x arrives f32 (single HBM read); cast to bf16 on the VPU right before the
    # MXU push.  All accumulation / elementwise math stays f32.
    x = x_ref[...].astype(jnp.bfloat16)
    h = jnp.dot(x, we1_ref[...], preferred_element_type=jnp.float32) + be1_ref[...]
    h = jnp.maximum(h, 0.0)

    # ---- fused encoder head: [mu | logvar] in one matmul ----
    head = (jnp.dot(h, whead_ref[...], preferred_element_type=jnp.float32)
            + bhead_ref[...])
    mu = head[:, :LATENT]
    logvar = head[:, LATENT:]

    # ---- reparameterize: z = mu + (eps * eps_std) * exp(0.5 * logvar) ----
    std = jnp.exp(0.5 * logvar)
    z = mu + (eps_ref[...] * eps_std) * std

    # ---- fused z-consumers: [decoder hidden | property hidden] ----
    zh = jnp.dot(z, wzh_ref[...], preferred_element_type=jnp.float32) + bzh_ref[...]
    zh = jnp.maximum(zh, 0.0)
    dh = zh[:, :HID]
    ph = zh[:, HID:]

    # ---- property_net output ----
    prop = jnp.dot(ph, wp2_ref[...], preferred_element_type=jnp.float32) + bp2_ref[...]

    # ---- decoder output (Wd2 is bf16; f32 accumulate) ----
    rec = (jnp.dot(dh.astype(jnp.bfloat16), wd2_ref[...],
                   preferred_element_type=jnp.float32) + bd2_ref[...])

    # ---- normalize: sigmoid via tanh (one EUP op + cheap VPU mul/add) ----
    recon = 0.5 * jnp.tanh(0.5 * rec) + 0.5
    recon_ref[...] = recon.astype(recon_ref.dtype)   # bf16 writeback

    # ---- pack tiny outputs into one lane-dense slab ----
    pad = jnp.zeros((tb, SMALL_W - 2 * LATENT - 1), jnp.float32)
    small_ref[...] = jnp.concatenate([head, prop, pad], axis=-1)


def prepare_params(params):
    """One-time weight preprocessing (bf16 casts + head fusion).

    Call ONCE and reuse across forward passes -- hoisting this out of
    vae_forward removes ~0.5 MiB of per-call weight read/write traffic.
    """
    prepared = dict(
        we1=params["we1"].astype(jnp.bfloat16),                            # big -> bf16
        be1=params["be1"],
        whead=jnp.concatenate([params["wmu"], params["wlv"]], axis=1),     # (HID, 2*LATENT)
        bhead=jnp.concatenate([params["bmu"], params["blv"]], axis=1),     # (1, 2*LATENT)
        wzh=jnp.concatenate([params["wd1"], params["wp1"]], axis=1),       # (LATENT, HID+PROP_HID)
        bzh=jnp.concatenate([params["bd1"], params["bp1"]], axis=1),       # (1, HID+PROP_HID)
        wp2=params["wp2"],
        bp2=params["bp2"],
        wd2=params["wd2"].astype(jnp.bfloat16),                            # big -> bf16
        bd2=params["bd2"],
    )
    return jax.tree_util.tree_map(jnp.asarray, prepared)


def _round_up(n, m):
    return ((n + m - 1) // m) * m


def _tile_config(b):
    """Generation-aware batch tile + VMEM limit."""
    kind = ""
    try:
        kind = jax.devices()[0].device_kind.lower()
    except Exception:
        pass
    is_v7 = "7" in kind
    if is_v7:
        # v7x: 64 MiB physical / 32 MiB scoped VMEM -> smaller tile cap.
        cap = 512
        vmem_limit = 48 * 1024 * 1024
    else:
        # v5e / v6e: 128 MiB physical VMEM; raise past the scoped default so
        # 512-1024 row tiles (>=85% of HBM roofline) fit double-buffered.
        cap = 1024
        vmem_limit = 64 * 1024 * 1024

    # Round to multiples of 16: bf16 tiles (x cast, recon) use (16,128) sublane tiling.
    tile_b = min(cap, max(16, _round_up(b, 16)))
    if is_v7 and b >= 32:
        # Ensure the grid has >= 2 steps so ("parallel",) shards over both TCs.
        tile_b = min(tile_b, max(16, _round_up(pl.cdiv(b, 2), 16)))
    return tile_b, vmem_limit


def vae_forward(x_nchw, eps, prepared, eps_std=EPS_STD):
    """x_nchw: [B, C, H, W] float32.  `prepared` from prepare_params().

    Returns (recon, mu, logvar, prop)."""
    b = x_nchw.shape[0]
    x_flat = x_nchw.reshape(b, -1).astype(DTYPE)    # torch .view(B, -1); kernel casts to bf16
    eps = eps.astype(DTYPE)

    tile_b, vmem_limit = _tile_config(b)
    b_pad = pl.cdiv(b, tile_b) * tile_b
    if b_pad != b:
        x_flat = jnp.pad(x_flat, ((0, b_pad - b), (0, 0)))
        eps = jnp.pad(eps, ((0, b_pad - b), (0, 0)))
    grid = (b_pad // tile_b,)

    def batch_spec(width):
        return pl.BlockSpec((tile_b, width), lambda i: (i, 0))

    def resident_spec(arr):
        # Full-array block, constant index -> DMA'd once, stays VMEM-resident.
        # TODO(synk): pipeline_mode=pl.Buffered(1) would drop the second VMEM
        # copy of each resident weight; left at default for portability.
        return pl.BlockSpec(arr.shape, lambda i: (0, 0))

    weight_args = (prepared["we1"], prepared["be1"],
                   prepared["whead"], prepared["bhead"],
                   prepared["wzh"], prepared["bzh"],
                   prepared["wp2"], prepared["bp2"],
                   prepared["wd2"], prepared["bd2"])
    args = (x_flat, eps) + weight_args

    in_specs = ([batch_spec(D_IN), batch_spec(LATENT)]
                + [resident_spec(a) for a in weight_args])

    out_shape = (
        jax.ShapeDtypeStruct((b_pad, D_IN), jnp.bfloat16),   # recon (flattened, bf16 writeback)
        jax.ShapeDtypeStruct((b_pad, SMALL_W), DTYPE),       # packed [mu | logvar | prop | pad]
    )
    out_specs = (batch_spec(D_IN), batch_spec(SMALL_W))

    kernel = functools.partial(_vae_kernel, float(eps_std))

    recon_flat, small = pl.pallas_call(
        kernel,
        grid=grid,
        in_specs=in_specs,
        out_specs=out_specs,
        out_shape=out_shape,
        compiler_params=pltpu.CompilerParams(
            dimension_semantics=("parallel",),
            vmem_limit_bytes=vmem_limit),
    )(*args)

    recon = recon_flat[:b].astype(DTYPE).reshape(x_nchw.shape)
    mu = small[:b, :LATENT]
    logvar = small[:b, LATENT:2 * LATENT]
    prop = small[:b, 2 * LATENT:2 * LATENT + 1]
    return recon, mu, logvar, prop


def init_params(key):
    """Deterministic parameter init (shapes implied by the concrete MLP VAE)."""
    ks = jax.random.split(key, 8)

    def lin(k, fan_in, fan_out):
        scale = 1.0 / jnp.sqrt(fan_in)
        w = jax.random.uniform(k, (fan_in, fan_out), DTYPE, -scale, scale)
        b = jnp.zeros((1, fan_out), DTYPE)
        return w, b

    we1, be1 = lin(ks[0], D_IN, HID)
    wmu, bmu = lin(ks[1], HID, LATENT)
    wlv, blv = lin(ks[2], HID, LATENT)
    wp1, bp1 = lin(ks[3], LATENT, PROP_HID)
    wp2, bp2 = lin(ks[4], PROP_HID, 1)
    wd1, bd1 = lin(ks[5], LATENT, HID)
    wd2, bd2 = lin(ks[6], HID, D_IN)
    return dict(we1=we1, be1=be1, wmu=wmu, bmu=bmu, wlv=wlv, blv=blv,
                wp1=wp1, bp1=bp1, wp2=wp2, bp2=bp2,
                wd1=wd1, bd1=bd1, wd2=wd2, bd2=bd2)


def reference_forward(x_nchw, eps, params, eps_std=EPS_STD):
    """Pure-JAX reference, using the same bf16 precision policy for big matmuls."""
    x = x_nchw.reshape(x_nchw.shape[0], -1).astype(jnp.bfloat16)
    we1 = params["we1"].astype(jnp.bfloat16)
    wd2 = params["wd2"].astype(jnp.bfloat16)
    h = jax.nn.relu(jnp.dot(x, we1, preferred_element_type=jnp.float32) + params["be1"])
    mu = h @ params["wmu"] + params["bmu"]
    logvar = h @ params["wlv"] + params["blv"]
    z = mu + (eps * eps_std) * jnp.exp(0.5 * logvar)
    ph = jax.nn.relu(z @ params["wp1"] + params["bp1"])
    prop = ph @ params["wp2"] + params["bp2"]
    dh = jax.nn.relu(z @ params["wd1"] + params["bd1"])
    rec = (jnp.dot(dh.astype(jnp.bfloat16), wd2, preferred_element_type=jnp.float32)
           + params["bd2"])
    recon = jax.nn.sigmoid(rec)
    return recon.reshape(x_nchw.shape), mu, logvar, prop


if __name__ == "__main__":
    key = jax.random.PRNGKey(0)
    k_x, k_eps, k_p = jax.random.split(key, 3)

    x = jax.random.normal(k_x, (B, C, H, W), DTYPE)
    # torch.randn(batch, latent_dim) equivalent, generated deterministically.
    eps = jax.random.normal(k_eps, (B, LATENT), DTYPE)
    params = init_params(k_p)

    # One-time weight preprocessing, outside the hot path.
    prepared = prepare_params(params)
    jax.block_until_ready(prepared)

    # Jit the wrapper so the (tiny) pad / slice / reshape glue fuses with the call.
    fwd = jax.jit(lambda xx, ee, pp: vae_forward(xx, ee, pp))

    recon, mu, logvar, prop = fwd(x, eps, prepared)
    jax.block_until_ready((recon, mu, logvar, prop))

    # sanity check vs pure-JAX reference
    r_recon, r_mu, r_logvar, r_prop = reference_forward(x, eps, params)
    assert recon.shape == (B, C, H, W)
    assert mu.shape == (B, LATENT) and logvar.shape == (B, LATENT)
    assert prop.shape == (B, 1)
    assert jnp.allclose(mu, r_mu, atol=1e-3)
    assert jnp.allclose(logvar, r_logvar, atol=1e-3)
    assert jnp.allclose(prop, r_prop, atol=1e-3)
    # recon is written back in bf16 -> ~4e-3 rounding on [0,1] sigmoid outputs
    assert jnp.allclose(recon, r_recon, atol=1e-2)

    print("KERNEL_OK")
</pallas_src>

<mosaic_0001>
module attributes {stable_mosaic.version = 11 : i64} {
  func.func @_vae_kernel(%arg0: i32, %arg1: memref<16x1024xf32, #tpu.memory_space<vmem>>, %arg2: memref<16x8xf32, #tpu.memory_space<vmem>>, %arg3: memref<1024x32xbf16, #tpu.memory_space<vmem>>, %arg4: memref<1x32xf32, #tpu.memory_space<vmem>>, %arg5: memref<32x16xf32, #tpu.memory_space<vmem>>, %arg6: memref<1x16xf32, #tpu.memory_space<vmem>>, %arg7: memref<8x48xf32, #tpu.memory_space<vmem>>, %arg8: memref<1x48xf32, #tpu.memory_space<vmem>>, %arg9: memref<16x1xf32, #tpu.memory_space<vmem>>, %arg10: memref<1x1xf32, #tpu.memory_space<vmem>>, %arg11: memref<32x1024xbf16, #tpu.memory_space<vmem>>, %arg12: memref<1x1024xf32, #tpu.memory_space<vmem>>, %arg13: memref<16x1024xbf16, #tpu.memory_space<vmem>>, %arg14: memref<16x128xf32, #tpu.memory_space<vmem>>) attributes {dimension_semantics = [#tpu.dimension_semantics<parallel>], iteration_bounds = array<i64: 1>, scalar_prefetch = 0 : i64, scratch_operands = 0 : i64, tpu.core_type = #tpu.core_type<tc>, window_params = [{transform_indices = @transform_0, window_bounds = array<i64: 16, 1024>}, {transform_indices = @transform_1, window_bounds = array<i64: 16, 8>}, {pipeline_mode = #tpu.pipeline_mode<synchronous>, transform_indices = @transform_2, window_bounds = array<i64: 1024, 32>}, {pipeline_mode = #tpu.pipeline_mode<synchronous>, transform_indices = @transform_3, window_bounds = array<i64: 1, 32>}, {pipeline_mode = #tpu.pipeline_mode<synchronous>, transform_indices = @transform_4, window_bounds = array<i64: 32, 16>}, {pipeline_mode = #tpu.pipeline_mode<synchronous>, transform_indices = @transform_5, window_bounds = array<i64: 1, 16>}, {pipeline_mode = #tpu.pipeline_mode<synchronous>, transform_indices = @transform_6, window_bounds = array<i64: 8, 48>}, {pipeline_mode = #tpu.pipeline_mode<synchronous>, transform_indices = @transform_7, window_bounds = array<i64: 1, 48>}, {pipeline_mode = #tpu.pipeline_mode<synchronous>, transform_indices = @transform_8, window_bounds = array<i64: 16, 1>}, {pipeline_mode = #tpu.pipeline_mode<synchronous>, transform_indices = @transform_9, window_bounds = array<i64: 1, 1>}, {pipeline_mode = #tpu.pipeline_mode<synchronous>, transform_indices = @transform_10, window_bounds = array<i64: 32, 1024>}, {pipeline_mode = #tpu.pipeline_mode<synchronous>, transform_indices = @transform_11, window_bounds = array<i64: 1, 1024>}, {transform_indices = @transform_12, window_bounds = array<i64: 16, 1024>}, {transform_indices = @transform_13, window_bounds = array<i64: 16, 128>}]} {
    %c0 = arith.constant 0 : index
    %c0_0 = arith.constant 0 : index
    %0 = vector.load %arg1[%c0, %c0_0] : memref<16x1024xf32, #tpu.memory_space<vmem>>, vector<16x1024xf32>
    %1 = arith.truncf %0 : vector<16x1024xf32> to vector<16x1024xbf16>
    %c0_1 = arith.constant 0 : index
    %c0_2 = arith.constant 0 : index
    %2 = vector.load %arg3[%c0_1, %c0_2] : memref<1024x32xbf16, #tpu.memory_space<vmem>>, vector<1024x32xbf16>
    %cst = arith.constant dense<0.000000e+00> : vector<16x32xf32>
    %3 = tpu.matmul %1, %2, %cst {dimension_numbers = #tpu.dot_dimension_numbers<[1], [0], [0], [1], [0, 0, 1, 1], [], []>} : vector<16x1024xbf16>, vector<1024x32xbf16>, vector<16x32xf32> -> vector<16x32xf32>
    %c0_3 = arith.constant 0 : index
    %c0_4 = arith.constant 0 : index
    %4 = vector.load %arg4[%c0_3, %c0_4] : memref<1x32xf32, #tpu.memory_space<vmem>>, vector<1x32xf32>
    %5 = vector.broadcast %4 : vector<1x32xf32> to vector<16x32xf32>
    %6 = arith.addf %3, %5 : vector<16x32xf32>
    %cst_5 = arith.constant 0.000000e+00 : f32
    %7 = vector.broadcast %cst_5 : f32 to vector<16x32xf32>
    %8 = arith.maximumf %6, %7 : vector<16x32xf32>
    %c0_6 = arith.constant 0 : index
    %c0_7 = arith.constant 0 : index
    %9 = vector.load %arg5[%c0_6, %c0_7] : memref<32x16xf32, #tpu.memory_space<vmem>>, vector<32x16xf32>
    %cst_8 = arith.constant dense<0.000000e+00> : vector<16x16xf32>
    %10 = tpu.matmul %8, %9, %cst_8 {dimension_numbers = #tpu.dot_dimension_numbers<[1], [0], [0], [1], [0, 0, 1, 1], [], []>} : vector<16x32xf32>, vector<32x16xf32>, vector<16x16xf32> -> vector<16x16xf32>
    %c0_9 = arith.constant 0 : index
    %c0_10 = arith.constant 0 : index
    %11 = vector.load %arg6[%c0_9, %c0_10] : memref<1x16xf32, #tpu.memory_space<vmem>>, vector<1x16xf32>
    %12 = vector.broadcast %11 : vector<1x16xf32> to vector<16x16xf32>
    %13 = arith.addf %10, %12 : vector<16x16xf32>
    %14 = vector.extract_strided_slice %13 {offsets = [0, 0], sizes = [16, 8], strides = [1, 1]} : vector<16x16xf32> to vector<16x8xf32>
    %15 = vector.extract_strided_slice %13 {offsets = [0, 8], sizes = [16, 8], strides = [1, 1]} : vector<16x16xf32> to vector<16x8xf32>
    %cst_11 = arith.constant 5.000000e-01 : f32
    %16 = vector.broadcast %cst_11 : f32 to vector<16x8xf32>
    %17 = arith.mulf %16, %15 : vector<16x8xf32>
    %18 = math.exp %17 : vector<16x8xf32>
    %c0_12 = arith.constant 0 : index
    %c0_13 = arith.constant 0 : index
    %19 = vector.load %arg2[%c0_12, %c0_13] : memref<16x8xf32, #tpu.memory_space<vmem>>, vector<16x8xf32>
    %cst_14 = arith.constant 1.000000e+00 : f32
    %20 = vector.broadcast %cst_14 : f32 to vector<16x8xf32>
    %21 = arith.mulf %19, %20 : vector<16x8xf32>
    %22 = arith.mulf %21, %18 : vector<16x8xf32>
    %23 = arith.addf %14, %22 : vector<16x8xf32>
    %c0_15 = arith.constant 0 : index
    %c0_16 = arith.constant 0 : index
    %24 = vector.load %arg7[%c0_15, %c0_16] : memref<8x48xf32, #tpu.memory_space<vmem>>, vector<8x48xf32>
    %cst_17 = arith.constant dense<0.000000e+00> : vector<16x48xf32>
    %25 = tpu.matmul %23, %24, %cst_17 {dimension_numbers = #tpu.dot_dimension_numbers<[1], [0], [0], [1], [0, 0, 1, 1], [], []>} : vector<16x8xf32>, vector<8x48xf32>, vector<16x48xf32> -> vector<16x48xf32>
    %c0_18 = arith.constant 0 : index
    %c0_19 = arith.constant 0 : index
    %26 = vector.load %arg8[%c0_18, %c0_19] : memref<1x48xf32, #tpu.memory_space<vmem>>, vector<1x48xf32>
    %27 = vector.broadcast %26 : vector<1x48xf32> to vector<16x48xf32>
    %28 = arith.addf %25, %27 : vector<16x48xf32>
    %cst_20 = arith.constant 0.000000e+00 : f32
    %29 = vector.broadcast %cst_20 : f32 to vector<16x48xf32>
    %30 = arith.maximumf %28, %29 : vector<16x48xf32>
    %31 = vector.extract_strided_slice %30 {offsets = [0, 0], sizes = [16, 32], strides = [1, 1]} : vector<16x48xf32> to vector<16x32xf32>
    %32 = vector.extract_strided_slice %30 {offsets = [0, 32], sizes = [16, 16], strides = [1, 1]} : vector<16x48xf32> to vector<16x16xf32>
    %c0_21 = arith.constant 0 : index
    %c0_22 = arith.constant 0 : index
    %33 = vector.load %arg9[%c0_21, %c0_22] : memref<16x1xf32, #tpu.memory_space<vmem>>, vector<16x1xf32>
    %cst_23 = arith.constant dense<0.000000e+00> : vector<16x1xf32>
    %34 = tpu.matmul %32, %33, %cst_23 {dimension_numbers = #tpu.dot_dimension_numbers<[1], [0], [0], [1], [0, 0, 1, 1], [], []>} : vector<16x16xf32>, vector<16x1xf32>, vector<16x1xf32> -> vector<16x1xf32>
    %c0_24 = arith.constant 0 : index
    %c0_25 = arith.constant 0 : index
    %35 = vector.load %arg10[%c0_24, %c0_25] : memref<1x1xf32, #tpu.memory_space<vmem>>, vector<1x1xf32>
    %36 = vector.broadcast %35 : vector<1x1xf32> to vector<16x1xf32>
    %37 = arith.addf %34, %36 : vector<16x1xf32>
    %38 = arith.truncf %31 : vector<16x32xf32> to vector<16x32xbf16>
    %c0_26 = arith.constant 0 : index
    %c0_27 = arith.constant 0 : index
    %39 = vector.load %arg11[%c0_26, %c0_27] : memref<32x1024xbf16, #tpu.memory_space<vmem>>, vector<32x1024xbf16>
    %cst_28 = arith.constant dense<0.000000e+00> : vector<16x1024xf32>
    %40 = tpu.matmul %38, %39, %cst_28 {dimension_numbers = #tpu.dot_dimension_numbers<[1], [0], [0], [1], [0, 0, 1, 1], [], []>} : vector<16x32xbf16>, vector<32x1024xbf16>, vector<16x1024xf32> -> vector<16x1024xf32>
    %c0_29 = arith.constant 0 : index
    %c0_30 = arith.constant 0 : index
    %41 = vector.load %arg12[%c0_29, %c0_30] : memref<1x1024xf32, #tpu.memory_space<vmem>>, vector<1x1024xf32>
    %42 = vector.broadcast %41 : vector<1x1024xf32> to vector<16x1024xf32>
    %43 = arith.addf %40, %42 : vector<16x1024xf32>
    %cst_31 = arith.constant 5.000000e-01 : f32
    %44 = vector.broadcast %cst_31 : f32 to vector<16x1024xf32>
    %45 = arith.mulf %44, %43 : vector<16x1024xf32>
    %46 = math.tanh %45 : vector<16x1024xf32>
    %cst_32 = arith.constant 5.000000e-01 : f32
    %47 = vector.broadcast %cst_32 : f32 to vector<16x1024xf32>
    %48 = arith.mulf %47, %46 : vector<16x1024xf32>
    %cst_33 = arith.constant 5.000000e-01 : f32
    %49 = vector.broadcast %cst_33 : f32 to vector<16x1024xf32>
    %50 = arith.addf %48, %49 : vector<16x1024xf32>
    %51 = arith.truncf %50 : vector<16x1024xf32> to vector<16x1024xbf16>
    %c0_34 = arith.constant 0 : index
    %c0_35 = arith.constant 0 : index
    %52 = vector.load %arg13[%c0_34, %c0_35] : memref<16x1024xbf16, #tpu.memory_space<vmem>>, vector<16x1024xbf16>
    tpu.vector_store %arg13[%c0_34, %c0_35], %51 {strides = array<i32>} : memref<16x1024xbf16, #tpu.memory_space<vmem>>, vector<16x1024xbf16>,
    %cst_36 = arith.constant 0.000000e+00 : f32
    %53 = vector.broadcast %cst_36 : f32 to vector<16x111xf32>
    %54 = tpu.concatenate %13, %37, %53 in 1 : vector<16x16xf32>, vector<16x1xf32>, vector<16x111xf32> -> vector<16x128xf32>
    %c0_37 = arith.constant 0 : index
    %c0_38 = arith.constant 0 : index
    %55 = vector.load %arg14[%c0_37, %c0_38] : memref<16x128xf32, #tpu.memory_space<vmem>>, vector<16x128xf32>
    tpu.vector_store %arg14[%c0_37, %c0_38], %54 {strides = array<i32>} : memref<16x128xf32, #tpu.memory_space<vmem>>, vector<16x128xf32>,
    return
  }
  func.func @transform_0(%arg0: i32) -> (i32, i32) {
    %c0_i32 = arith.constant 0 : i32
    %c0_i32_0 = arith.constant 0 : i32
    return %arg0, %c0_i32 : i32, i32
  }
  func.func @transform_1(%arg0: i32) -> (i32, i32) {
    %c0_i32 = arith.constant 0 : i32
    %c0_i32_0 = arith.constant 0 : i32
    return %arg0, %c0_i32 : i32, i32
  }
  func.func @transform_2(%arg0: i32) -> (i32, i32) {
    %c0_i32 = arith.constant 0 : i32
    %c0_i32_0 = arith.constant 0 : i32
    %c0_i32_1 = arith.constant 0 : i32
    return %c0_i32, %c0_i32_0 : i32, i32
  }
  func.func @transform_3(%arg0: i32) -> (i32, i32) {
    %c0_i32 = arith.constant 0 : i32
    %c0_i32_0 = arith.constant 0 : i32
    %c0_i32_1 = arith.constant 0 : i32
    return %c0_i32, %c0_i32_0 : i32, i32
  }
  func.func @transform_4(%arg0: i32) -> (i32, i32) {
    %c0_i32 = arith.constant 0 : i32
    %c0_i32_0 = arith.constant 0 : i32
    %c0_i32_1 = arith.constant 0 : i32
    return %c0_i32, %c0_i32_0 : i32, i32
  }
  func.func @transform_5(%arg0: i32) -> (i32, i32) {
    %c0_i32 = arith.constant 0 : i32
    %c0_i32_0 = arith.constant 0 : i32
    %c0_i32_1 = arith.constant 0 : i32
    return %c0_i32, %c0_i32_0 : i32, i32
  }
  func.func @transform_6(%arg0: i32) -> (i32, i32) {
    %c0_i32 = arith.constant 0 : i32
    %c0_i32_0 = arith.constant 0 : i32
    %c0_i32_1 = arith.constant 0 : i32
    return %c0_i32, %c0_i32_0 : i32, i32
  }
  func.func @transform_7(%arg0: i32) -> (i32, i32) {
    %c0_i32 = arith.constant 0 : i32
    %c0_i32_0 = arith.constant 0 : i32
    %c0_i32_1 = arith.constant 0 : i32
    return %c0_i32, %c0_i32_0 : i32, i32
  }
  func.func @transform_8(%arg0: i32) -> (i32, i32) {
    %c0_i32 = arith.constant 0 : i32
    %c0_i32_0 = arith.constant 0 : i32
    %c0_i32_1 = arith.constant 0 : i32
    return %c0_i32, %c0_i32_0 : i32, i32
  }
  func.func @transform_9(%arg0: i32) -> (i32, i32) {
    %c0_i32 = arith.constant 0 : i32
    %c0_i32_0 = arith.constant 0 : i32
    %c0_i32_1 = arith.constant 0 : i32
    return %c0_i32, %c0_i32_0 : i32, i32
  }
  func.func @transform_10(%arg0: i32) -> (i32, i32) {
    %c0_i32 = arith.constant 0 : i32
    %c0_i32_0 = arith.constant 0 : i32
    %c0_i32_1 = arith.constant 0 : i32
    return %c0_i32, %c0_i32_0 : i32, i32
  }
  func.func @transform_11(%arg0: i32) -> (i32, i32) {
    %c0_i32 = arith.constant 0 : i32
    %c0_i32_0 = arith.constant 0 : i32
    %c0_i32_1 = arith.constant 0 : i32
    return %c0_i32, %c0_i32_0 : i32, i32
  }
  func.func @transform_12(%arg0: i32) -> (i32, i32) {
    %c0_i32 = arith.constant 0 : i32
    %c0_i32_0 = arith.constant 0 : i32
    return %arg0, %c0_i32 : i32, i32
  }
  func.func @transform_13(%arg0: i32) -> (i32, i32) {
    %c0_i32 = arith.constant 0 : i32
    %c0_i32_0 = arith.constant 0 : i32
    return %arg0, %c0_i32 : i32, i32
  }
}

</mosaic_0001>

<llo_original>
// kernel: _lambda_.1
$region0: #{_lambda_.1}
  #allocation0 [shape = 'u32[]', space=smem, size = 0x4, offset = 0x4, fixed_abs, tag = 'smem constant byte address 0x4 - core index']
  #allocation1 [shape = 'u32[144,128]{1,0:T(1,128)}', space=vmem, size = 0x12000, scoped, tag = 'internal scratch']
  #allocation2 [shape = 'f32[1,1]{1,0:T(1,128)S(1)}', space=vmem, size = 0x200, scoped, tag = 'scoped memory for _lambda_.1']
  %s0 = inlined_call_operand.hbm [shape: f32[16,1024], index: 0, kind: input, shape index: {}]
  %s1 = inlined_call_operand.hbm [shape: f32[16,8], index: 1, kind: input, shape index: {}]
  %s2 = inlined_call_operand.hbm [shape: bf16[1024,32], index: 2, kind: input, shape index: {}]
  %s3 = inlined_call_operand.hbm [shape: f32[1,32], index: 3, kind: input, shape index: {}]
  %s4 = inlined_call_operand.hbm [shape: f32[32,16], index: 4, kind: input, shape index: {}]
  %s5 = inlined_call_operand.hbm [shape: f32[1,16], index: 5, kind: input, shape index: {}]
  %s6 = inlined_call_operand.hbm [shape: f32[8,48], index: 6, kind: input, shape index: {}]
  %s7 = inlined_call_operand.hbm [shape: f32[1,48], index: 7, kind: input, shape index: {}]
  %s8 = inlined_call_operand.hbm [shape: f32[16,1], index: 8, kind: input, shape index: {}]
  %s9 = inlined_call_operand.<no memory space> [shape: f32[1,1], index: 9, kind: input, shape index: {}]
  %s10 = inlined_call_operand.hbm [shape: bf16[32,1024], index: 10, kind: input, shape index: {}]
  %s11 = inlined_call_operand.hbm [shape: f32[1,1024], index: 11, kind: input, shape index: {}]
  %s12 = inlined_call_operand.hbm [shape: bf16[16,1024], index: 12, kind: output, shape index: {0}]
  %s13 = inlined_call_operand.hbm [shape: f32[16,128], index: 13, kind: output, shape index: {1}]
  %14 = xla_tuple %s12, %s13
  %s15 = sld [smem:[#allocation0]]
  $region110: #{_lambda_.1} parent=0
    _
  %s17 = ssub.s32 1, %s15
  %s18 = scalar_select 0, %s17, %s15
  %v19 = vstv %s9
  %20 = vst [vmem:[#allocation2] sm:$0x1] %v19
  $region1: #{_lambda_.1} parent=0
    #allocation3 [shape = 'u8[65536]{0}', space=vmem, size = 0x10000, scoped, tag = 'input window, operand 0, single buffered']
    #allocation4 [shape = 's32[1]{0}', space=sflag, size = 0x4, scoped, tag = 'scoped memory for _lambda_.1']
    #allocation5 [shape = 's32[1]{0}', space=sflag, size = 0x4, scoped, tag = 'scoped memory for _lambda_.1']
    #allocation6 [shape = 'u8[8192]{0}', space=vmem, size = 0x2000, scoped, tag = 'input window, operand 1, single buffered']
    #allocation7 [shape = 's32[1]{0}', space=sflag, size = 0x4, scoped, tag = 'scoped memory for _lambda_.1']
    #allocation8 [shape = 'u8[262144]{0}', space=vmem, size = 0x40000, scoped, tag = 'input window, operand 2, single buffered']
    #allocation9 [shape = 'u8[512]{0}', space=vmem, size = 0x400, scoped, tag = 'input window, operand 3, single buffered']
    #allocation10 [shape = 's32[1]{0}', space=sflag, size = 0x4, scoped, tag = 'scoped memory for _lambda_.1']
    #allocation11 [shape = 'u8[16384]{0}', space=vmem, size = 0x4000, scoped, tag = 'input window, operand 4, single buffered']
    #allocation12 [shape = 'u8[512]{0}', space=vmem, size = 0x400, scoped, tag = 'input window, operand 5, single buffered']
    #allocation13 [shape = 's32[1]{0}', space=sflag, size = 0x4, scoped, tag = 'scoped memory for _lambda_.1']
    #allocation14 [shape = 'u8[4096]{0}', space=vmem, size = 0x1000, scoped, tag = 'input window, operand 6, single buffered']
    #allocation15 [shape = 'u8[512]{0}', space=vmem, size = 0x400, scoped, tag = 'input window, operand 7, single buffered']
    #allocation16 [shape = 's32[1]{0}', space=sflag, size = 0x4, scoped, tag = 'scoped memory for _lambda_.1']
    #allocation17 [shape = 'u8[8192]{0}', space=vmem, size = 0x2000, scoped, tag = 'input window, operand 8, single buffered']
    #allocation18 [shape = 'u8[65536]{0}', space=vmem, size = 0x10000, scoped, tag = 'input window, operand 10, single buffered']
    #allocation19 [shape = 's32[1]{0}', space=sflag, size = 0x4, scoped, tag = 'scoped memory for _lambda_.1']
    #allocation20 [shape = 'u8[4096]{0}', space=vmem, size = 0x1000, scoped, tag = 'input window, operand 11, single buffered']
    #allocation21 [shape = 'u8[32768]{0}', space=vmem, size = 0x8000, scoped, tag = 'output window, operand 0, single buffered']
    #allocation22 [shape = 'u8[8192]{0}', space=vmem, size = 0x2000, scoped, tag = 'output window, operand 1, single buffered']
    #allocation23 [shape = 's32[1]{0}', space=sflag, size = 0x4, scoped, tag = 'scoped memory for _lambda_.1']
    %21 = vsyncpa [#allocation4], 0
    %22 = vsyncpa [#allocation7], 0
    %23 = vsyncpa [#allocation10], 0
    %24 = vsyncpa [#allocation13], 0
    %25 = vsyncpa [#allocation16], 0
    %26 = vsyncpa [#allocation19], 0
    %27 = vsyncpa [#allocation5], 0
    %28 = vsyncpa [#allocation23], 0
    // Predicated region
    $region2: #{_lambda_.1} parent=1 // pred_check
      _
    $region3: #{_lambda_.1} parent=1 // pred_check_branch
      %30 = sbr.rel (0) target = $region5
    $region4: #{_lambda_.1} parent=1 // pred_region
      %s32 = ssub.s32 2048, 2048
      %33 = vsyncadd [#allocation4], %s32
      %s34 = sshll.u32 [#allocation3], 4
      %s35 = int_to_ptr.vmem [resolvable:$true] %s34
      %40 = dma.hbm_to_vmem [thread:$0]  %s0, 2048, %s35, [#allocation4], 1024, 1024, 64
    $region5: #{_lambda_.1} parent=1 // pred_fallthru
      _
    // Predicated region
    $region6: #{_lambda_.1} parent=1 // pred_check
      _
    $region7: #{_lambda_.1} parent=1 // pred_check_branch
      %42 = sbr.rel (0) target = $region9
    $region8: #{_lambda_.1} parent=1 // pred_region
      %s44 = ssub.s32 256, 256
      %45 = vsyncadd [#allocation7], %s44
      %s46 = sshll.u32 [#allocation6], 4
      %s47 = int_to_ptr.vmem [resolvable:$true] %s46
      %52 = dma.hbm_to_vmem [thread:$0]  %s1, 256, %s47, [#allocation7], 128, 128, 8
    $region9: #{_lambda_.1} parent=1 // pred_fallthru
      _
    // Predicated region
    $region10: #{_lambda_.1} parent=1 // pred_check
      _
    $region11: #{_lambda_.1} parent=1 // pred_check_branch
      %54 = sbr.rel (0) target = $region13
    $region12: #{_lambda_.1} parent=1 // pred_region
      %s56 = ssub.s32 8192, 8192
      %57 = vsyncadd [#allocation7], %s56
      %s58 = sshll.u32 [#allocation8], 4
      %s59 = int_to_ptr.vmem [resolvable:$true] %s58
      %64 = dma.hbm_to_vmem [thread:$0]  %s2, 8192, %s59, [#allocation7], 64, 64, 4
    $region13: #{_lambda_.1} parent=1 // pred_fallthru
      _
    // Predicated region
    $region14: #{_lambda_.1} parent=1 // pred_check
      _
    $region15: #{_lambda_.1} parent=1 // pred_check_branch
      %66 = sbr.rel (0) target = $region17
    $region16: #{_lambda_.1} parent=1 // pred_region
      %s68 = ssub.s32 16, 16
      %69 = vsyncadd [#allocation10], %s68
      %s71 = sshll.u32 [#allocation9], 4
      %s72 = int_to_ptr.vmem [resolvable:$true] %s71
      %74 = dma.hbm_to_vmem [thread:$0]  %s3, 16, %s72, [#allocation10]
    $region17: #{_lambda_.1} parent=1 // pred_fallthru
      _
    // Predicated region
    $region18: #{_lambda_.1} parent=1 // pred_check
      _
    $region19: #{_lambda_.1} parent=1 // pred_check_branch
      %76 = sbr.rel (0) target = $region21
    $region20: #{_lambda_.1} parent=1 // pred_region
      %s78 = ssub.s32 512, 512
      %79 = vsyncadd [#allocation10], %s78
      %s80 = sshll.u32 [#allocation11], 4
      %s81 = int_to_ptr.vmem [resolvable:$true] %s80
      %86 = dma.hbm_to_vmem [thread:$0]  %s4, 512, %s81, [#allocation10], 128, 128, 8
    $region21: #{_lambda_.1} parent=1 // pred_fallthru
      _
    // Predicated region
    $region22: #{_lambda_.1} parent=1 // pred_check
      _
    $region23: #{_lambda_.1} parent=1 // pred_check_branch
      %88 = sbr.rel (0) target = $region25
    $region24: #{_lambda_.1} parent=1 // pred_region
      %s90 = ssub.s32 16, 16
      %91 = vsyncadd [#allocation13], %s90
      %s93 = sshll.u32 [#allocation12], 4
      %s94 = int_to_ptr.vmem [resolvable:$true] %s93
      %96 = dma.hbm_to_vmem [thread:$0]  %s5, 16, %s94, [#allocation13]
    $region25: #{_lambda_.1} parent=1 // pred_fallthru
      _
    // Predicated region
    $region26: #{_lambda_.1} parent=1 // pred_check
      _
    $region27: #{_lambda_.1} parent=1 // pred_check_branch
      %98 = sbr.rel (0) target = $region29
    $region28: #{_lambda_.1} parent=1 // pred_region
      %s100 = ssub.s32 128, 128
      %101 = vsyncadd [#allocation13], %s100
      %s103 = sshll.u32 [#allocation14], 4
      %s104 = int_to_ptr.vmem [resolvable:$true] %s103
      %106 = dma.hbm_to_vmem [thread:$0]  %s6, 128, %s104, [#allocation13]
    $region29: #{_lambda_.1} parent=1 // pred_fallthru
      _
    // Predicated region
    $region30: #{_lambda_.1} parent=1 // pred_check
      _
    $region31: #{_lambda_.1} parent=1 // pred_check_branch
      %108 = sbr.rel (0) target = $region33
    $region32: #{_lambda_.1} parent=1 // pred_region
      %s110 = ssub.s32 16, 16
      %111 = vsyncadd [#allocation16], %s110
      %s113 = sshll.u32 [#allocation15], 4
      %s114 = int_to_ptr.vmem [resolvable:$true] %s113
      %116 = dma.hbm_to_vmem [thread:$0]  %s7, 16, %s114, [#allocation16]
    $region33: #{_lambda_.1} parent=1 // pred_fallthru
      _
    // Predicated region
    $region34: #{_lambda_.1} parent=1 // pred_check
      _
    $region35: #{_lambda_.1} parent=1 // pred_check_branch
      %118 = sbr.rel (0) target = $region37
    $region36: #{_lambda_.1} parent=1 // pred_region
      %s120 = ssub.s32 256, 256
      %121 = vsyncadd [#allocation16], %s120
      %s122 = sshll.u32 [#allocation17], 4
      %s123 = int_to_ptr.vmem [resolvable:$true] %s122
      %128 = dma.hbm_to_vmem [thread:$0]  %s8, 256, %s123, [#allocation16], 128, 128, 8
    $region37: #{_lambda_.1} parent=1 // pred_fallthru
      _
    // Predicated region
    $region38: #{_lambda_.1} parent=1 // pred_check
      _
    $region39: #{_lambda_.1} parent=1 // pred_check_branch
      %130 = sbr.rel (0) target = $region41
    $region40: #{_lambda_.1} parent=1 // pred_region
      _
    $region41: #{_lambda_.1} parent=1 // pred_fallthru
      _
    // Predicated region
    $region42: #{_lambda_.1} parent=1 // pred_check
      _
    $region43: #{_lambda_.1} parent=1 // pred_check_branch
      %132 = sbr.rel (0) target = $region45
    $region44: #{_lambda_.1} parent=1 // pred_region
      %s134 = ssub.s32 2048, 2048
      %135 = vsyncadd [#allocation19], %s134
      %s136 = sshll.u32 [#allocation18], 4
      %s137 = int_to_ptr.vmem [resolvable:$true] %s136
      %142 = dma.hbm_to_vmem [thread:$0]  %s10, 2048, %s137, [#allocation19], 512, 512, 32
    $region45: #{_lambda_.1} parent=1 // pred_fallthru
      _
    // Predicated region
    $region46: #{_lambda_.1} parent=1 // pred_check
      _
    $region47: #{_lambda_.1} parent=1 // pred_check_branch
      %144 = sbr.rel (0) target = $region49
    $region48: #{_lambda_.1} parent=1 // pred_region
      %s146 = ssub.s32 128, 128
      %147 = vsyncadd [#allocation19], %s146
      %s149 = sshll.u32 [#allocation20], 4
      %s150 = int_to_ptr.vmem [resolvable:$true] %s149
      %152 = dma.hbm_to_vmem [thread:$0]  %s11, 128, %s150, [#allocation19]
    $region49: #{_lambda_.1} parent=1 // pred_fallthru
      _
    // Predicated region
    $region50: #{_lambda_.1} parent=1 // pred_check
      _
    $region51: #{_lambda_.1} parent=1 // pred_check_branch
      %154 = sbr.rel (0) target = $region53
    $region52: #{_lambda_.1} parent=1 // pred_region
      %155 = dma.done [#allocation4], 2048
    $region53: #{_lambda_.1} parent=1 // pred_fallthru
      _
    // Predicated region
    $region54: #{_lambda_.1} parent=1 // pred_check
      _
    $region55: #{_lambda_.1} parent=1 // pred_check_branch
      %157 = sbr.rel (0) target = $region57
    $region56: #{_lambda_.1} parent=1 // pred_region
      %158 = dma.done [#allocation7], 256
    $region57: #{_lambda_.1} parent=1 // pred_fallthru
      _
    // Predicated region
    $region58: #{_lambda_.1} parent=1 // pred_check
      _
    $region59: #{_lambda_.1} parent=1 // pred_check_branch
      %160 = sbr.rel (0) target = $region61
    $region60: #{_lambda_.1} parent=1 // pred_region
      %161 = dma.done [#allocation7], 8192
    $region61: #{_lambda_.1} parent=1 // pred_fallthru
      _
    // Predicated region
    $region62: #{_lambda_.1} parent=1 // pred_check
      _
    $region63: #{_lambda_.1} parent=1 // pred_check_branch
      %163 = sbr.rel (0) target = $region65
    $region64: #{_lambda_.1} parent=1 // pred_region
      %164 = dma.done [#allocation10], 16
    $region65: #{_lambda_.1} parent=1 // pred_fallthru
      _
    // Predicated region
    $region66: #{_lambda_.1} parent=1 // pred_check
      _
    $region67: #{_lambda_.1} parent=1 // pred_check_branch
      %166 = sbr.rel (0) target = $region69
    $region68: #{_lambda_.1} parent=1 // pred_region
      %167 = dma.done [#allocation10], 512
    $region69: #{_lambda_.1} parent=1 // pred_fallthru
      _
    // Predicated region
    $region70: #{_lambda_.1} parent=1 // pred_check
      _
    $region71: #{_lambda_.1} parent=1 // pred_check_branch
      %169 = sbr.rel (0) target = $region73
    $region72: #{_lambda_.1} parent=1 // pred_region
      %170 = dma.done [#allocation13], 16
    $region73: #{_lambda_.1} parent=1 // pred_fallthru
      _
    // Predicated region
    $region74: #{_lambda_.1} parent=1 // pred_check
      _
    $region75: #{_lambda_.1} parent=1 // pred_check_branch
      %172 = sbr.rel (0) target = $region77
    $region76: #{_lambda_.1} parent=1 // pred_region
      %173 = dma.done [#allocation13], 128
    $region77: #{_lambda_.1} parent=1 // pred_fallthru
      _
    // Predicated region
    $region78: #{_lambda_.1} parent=1 // pred_check
      _
    $region79: #{_lambda_.1} parent=1 // pred_check_branch
      %175 = sbr.rel (0) target = $region81
    $region80: #{_lambda_.1} parent=1 // pred_region
      %176 = dma.done [#allocation16], 16
    $region81: #{_lambda_.1} parent=1 // pred_fallthru
      _
    // Predicated region
    $region82: #{_lambda_.1} parent=1 // pred_check
      _
    $region83: #{_lambda_.1} parent=1 // pred_check_branch
      %178 = sbr.rel (0) target = $region85
    $region84: #{_lambda_.1} parent=1 // pred_region
      %179 = dma.done [#allocation16], 256
    $region85: #{_lambda_.1} parent=1 // pred_fallthru
      _
    // Predicated region
    $region86: #{_lambda_.1} parent=1 // pred_check
      _
    $region87: #{_lambda_.1} parent=1 // pred_check_branch
      %181 = sbr.rel (0) target = $region89
    $region88: #{_lambda_.1} parent=1 // pred_region
      %182 = dma.done [#allocation19], 2048
    $region89: #{_lambda_.1} parent=1 // pred_fallthru
      _
    // Predicated region
    $region90: #{_lambda_.1} parent=1 // pred_check
      _
    $region91: #{_lambda_.1} parent=1 // pred_check_branch
      %184 = sbr.rel (0) target = $region93
    $region92: #{_lambda_.1} parent=1 // pred_region
      %185 = dma.done [#allocation19], 128
    $region93: #{_lambda_.1} parent=1 // pred_fallthru
      _
    %v187 = vld [vmem:[#allocation3] sm:$0xff]
    %v188 = vld [vmem:[#allocation3 + $0x8] sm:$0xff]
    %v189 = vld [vmem:[#allocation3 + $0x10] sm:$0xff]
    %v190 = vld [vmem:[#allocation3 + $0x18] sm:$0xff]
    %v191 = vld [vmem:[#allocation3 + $0x20] sm:$0xff]
    %v192 = vld [vmem:[#allocation3 + $0x28] sm:$0xff]
    %v193 = vld [vmem:[#allocation3 + $0x30] sm:$0xff]
    %v194 = vld [vmem:[#allocation3 + $0x38] sm:$0xff]
    %v195 = vld [vmem:[#allocation3 + $0x40] sm:$0xff]
    %v196 = vld [vmem:[#allocation3 + $0x48] sm:$0xff]
    %v197 = vld [vmem:[#allocation3 + $0x50] sm:$0xff]
    %v198 = vld [vmem:[#allocation3 + $0x58] sm:$0xff]
    %v199 = vld [vmem:[#allocation3 + $0x60] sm:$0xff]
    %v200 = vld [vmem:[#allocation3 + $0x68] sm:$0xff]
    %v201 = vld [vmem:[#allocation3 + $0x70] sm:$0xff]
    %v202 = vld [vmem:[#allocation3 + $0x78] sm:$0xff]
    %v203 = vpack.c.bf16 %v195, %v187
    %v204 = vpack.c.bf16 %v196, %v188
    %v205 = vpack.c.bf16 %v197, %v189
    %v206 = vpack.c.bf16 %v198, %v190
    %v207 = vpack.c.bf16 %v199, %v191
    %v208 = vpack.c.bf16 %v200, %v192
    %v209 = vpack.c.bf16 %v201, %v193
    %v210 = vpack.c.bf16 %v202, %v194
    %v211 = vld [vmem:[#allocation8] sm:$0xf]
    %v212 = vld [vmem:[#allocation8 + $0x4] sm:$0xf]
    %v213 = vld [vmem:[#allocation8 + $0x8] sm:$0xf]
    %v214 = vld [vmem:[#allocation8 + $0xc] sm:$0xf]
    %v215 = vld [vmem:[#allocation8 + $0x10] sm:$0xf]
    %v216 = vld [vmem:[#allocation8 + $0x14] sm:$0xf]
    %v217 = vld [vmem:[#allocation8 + $0x18] sm:$0xf]
    %v218 = vld [vmem:[#allocation8 + $0x1c] sm:$0xf]
    %v219 = vld [vmem:[#allocation8 + $0x20] sm:$0xf]
    %v220 = vld [vmem:[#allocation8 + $0x24] sm:$0xf]
    %v221 = vld [vmem:[#allocation8 + $0x28] sm:$0xf]
    %v222 = vld [vmem:[#allocation8 + $0x2c] sm:$0xf]
    %v223 = vld [vmem:[#allocation8 + $0x30] sm:$0xf]
    %v224 = vld [vmem:[#allocation8 + $0x34] sm:$0xf]
    %v225 = vld [vmem:[#allocation8 + $0x38] sm:$0xf]
    %v226 = vld [vmem:[#allocation8 + $0x3c] sm:$0xf]
    %v227 = vld [vmem:[#allocation8 + $0x40] sm:$0xf]
    %v228 = vld [vmem:[#allocation8 + $0x44] sm:$0xf]
    %v229 = vld [vmem:[#allocation8 + $0x48] sm:$0xf]
    %v230 = vld [vmem:[#allocation8 + $0x4c] sm:$0xf]
    %v231 = vld [vmem:[#allocation8 + $0x50] sm:$0xf]
    %v232 = vld [vmem:[#allocation8 + $0x54] sm:$0xf]
    %v233 = vld [vmem:[#allocation8 + $0x58] sm:$0xf]
    %v234 = vld [vmem:[#allocation8 + $0x5c] sm:$0xf]
    %v235 = vld [vmem:[#allocation8 + $0x60] sm:$0xf]
    %v236 = vld [vmem:[#allocation8 + $0x64] sm:$0xf]
    %v237 = vld [vmem:[#allocation8 + $0x68] sm:$0xf]
    %v238 = vld [vmem:[#allocation8 + $0x6c] sm:$0xf]
    %v239 = vld [vmem:[#allocation8 + $0x70] sm:$0xf]
    %v240 = vld [vmem:[#allocation8 + $0x74] sm:$0xf]
    %v241 = vld [vmem:[#allocation8 + $0x78] sm:$0xf]
    %v242 = vld [vmem:[#allocation8 + $0x7c] sm:$0xf]
    %v243 = vld [vmem:[#allocation8 + $0x80] sm:$0xf]
    %v244 = vld [vmem:[#allocation8 + $0x84] sm:$0xf]
    %v245 = vld [vmem:[#allocation8 + $0x88] sm:$0xf]
    %v246 = vld [vmem:[#allocation8 + $0x8c] sm:$0xf]
    %v247 = vld [vmem:[#allocation8 + $0x90] sm:$0xf]
    %v248 = vld [vmem:[#allocation8 + $0x94] sm:$0xf]
    %v249 = vld [vmem:[#allocation8 + $0x98] sm:$0xf]
    %v250 = vld [vmem:[#allocation8 + $0x9c] sm:$0xf]
    %v251 = vld [vmem:[#allocation8 + $0xa0] sm:$0xf]
    %v252 = vld [vmem:[#allocation8 + $0xa4] sm:$0xf]
    %v253 = vld [vmem:[#allocation8 + $0xa8] sm:$0xf]
    %v254 = vld [vmem:[#allocation8 + $0xac] sm:$0xf]
    %v255 = vld [vmem:[#allocation8 + $0xb0] sm:$0xf]
    %v256 = vld [vmem:[#allocation8 + $0xb4] sm:$0xf]
    %v257 = vld [vmem:[#allocation8 + $0xb8] sm:$0xf]
    %v258 = vld [vmem:[#allocation8 + $0xbc] sm:$0xf]
    %v259 = vld [vmem:[#allocation8 + $0xc0] sm:$0xf]
    %v260 = vld [vmem:[#allocation8 + $0xc4] sm:$0xf]
    %v261 = vld [vmem:[#allocation8 + $0xc8] sm:$0xf]
    %v262 = vld [vmem:[#allocation8 + $0xcc] sm:$0xf]
    %v263 = vld [vmem:[#allocation8 + $0xd0] sm:$0xf]
    %v264 = vld [vmem:[#allocation8 + $0xd4] sm:$0xf]
    %v265 = vld [vmem:[#allocation8 + $0xd8] sm:$0xf]
    %v266 = vld [vmem:[#allocation8 + $0xdc] sm:$0xf]
    %v267 = vld [vmem:[#allocation8 + $0xe0] sm:$0xf]
    %v268 = vld [vmem:[#allocation8 + $0xe4] sm:$0xf]
    %v269 = vld [vmem:[#allocation8 + $0xe8] sm:$0xf]
    %v270 = vld [vmem:[#allocation8 + $0xec] sm:$0xf]
    %v271 = vld [vmem:[#allocation8 + $0xf0] sm:$0xf]
    %v272 = vld [vmem:[#allocation8 + $0xf4] sm:$0xf]
    %v273 = vld [vmem:[#allocation8 + $0xf8] sm:$0xf]
    %v274 = vld [vmem:[#allocation8 + $0xfc] sm:$0xf]
    %v275 = vld [vmem:[#allocation8 + $0x100] sm:$0xf]
    %v276 = vld [vmem:[#allocation8 + $0x104] sm:$0xf]
    %v277 = vld [vmem:[#allocation8 + $0x108] sm:$0xf]
    %v278 = vld [vmem:[#allocation8 + $0x10c] sm:$0xf]
    %v279 = vld [vmem:[#allocation8 + $0x110] sm:$0xf]
    %v280 = vld [vmem:[#allocation8 + $0x114] sm:$0xf]
    %v281 = vld [vmem:[#allocation8 + $0x118] sm:$0xf]
    %v282 = vld [vmem:[#allocation8 + $0x11c] sm:$0xf]
    %v283 = vld [vmem:[#allocation8 + $0x120] sm:$0xf]
    %v284 = vld [vmem:[#allocation8 + $0x124] sm:$0xf]
    %v285 = vld [vmem:[#allocation8 + $0x128] sm:$0xf]
    %v286 = vld [vmem:[#allocation8 + $0x12c] sm:$0xf]
    %v287 = vld [vmem:[#allocation8 + $0x130] sm:$0xf]
    %v288 = vld [vmem:[#allocation8 + $0x134] sm:$0xf]
    %v289 = vld [vmem:[#allocation8 + $0x138] sm:$0xf]
    %v290 = vld [vmem:[#allocation8 + $0x13c] sm:$0xf]
    %v291 = vld [vmem:[#allocation8 + $0x140] sm:$0xf]
    %v292 = vld [vmem:[#allocation8 + $0x144] sm:$0xf]
    %v293 = vld [vmem:[#allocation8 + $0x148] sm:$0xf]
    %v294 = vld [vmem:[#allocation8 + $0x14c] sm:$0xf]
    %v295 = vld [vmem:[#allocation8 + $0x150] sm:$0xf]
    %v296 = vld [vmem:[#allocation8 + $0x154] sm:$0xf]
    %v297 = vld [vmem:[#allocation8 + $0x158] sm:$0xf]
    %v298 = vld [vmem:[#allocation8 + $0x15c] sm:$0xf]
    %v299 = vld [vmem:[#allocation8 + $0x160] sm:$0xf]
    %v300 = vld [vmem:[#allocation8 + $0x164] sm:$0xf]
    %v301 = vld [vmem:[#allocation8 + $0x168] sm:$0xf]
    %v302 = vld [vmem:[#allocation8 + $0x16c] sm:$0xf]
    %v303 = vld [vmem:[#allocation8 + $0x170] sm:$0xf]
    %v304 = vld [vmem:[#allocation8 + $0x174] sm:$0xf]
    %v305 = vld [vmem:[#allocation8 + $0x178] sm:$0xf]
    %v306 = vld [vmem:[#allocation8 + $0x17c] sm:$0xf]
    %v307 = vld [vmem:[#allocation8 + $0x180] sm:$0xf]
    %v308 = vld [vmem:[#allocation8 + $0x184] sm:$0xf]
    %v309 = vld [vmem:[#allocation8 + $0x188] sm:$0xf]
    %v310 = vld [vmem:[#allocation8 + $0x18c] sm:$0xf]
    %v311 = vld [vmem:[#allocation8 + $0x190] sm:$0xf]
    %v312 = vld [vmem:[#allocation8 + $0x194] sm:$0xf]
    %v313 = vld [vmem:[#allocation8 + $0x198] sm:$0xf]
    %v314 = vld [vmem:[#allocation8 + $0x19c] sm:$0xf]
    %v315 = vld [vmem:[#allocation8 + $0x1a0] sm:$0xf]
    %v316 = vld [vmem:[#allocation8 + $0x1a4] sm:$0xf]
    %v317 = vld [vmem:[#allocation8 + $0x1a8] sm:$0xf]
    %v318 = vld [vmem:[#allocation8 + $0x1ac] sm:$0xf]
    %v319 = vld [vmem:[#allocation8 + $0x1b0] sm:$0xf]
    %v320 = vld [vmem:[#allocation8 + $0x1b4] sm:$0xf]
    %v321 = vld [vmem:[#allocation8 + $0x1b8] sm:$0xf]
    %v322 = vld [vmem:[#allocation8 + $0x1bc] sm:$0xf]
    %v323 = vld [vmem:[#allocation8 + $0x1c0] sm:$0xf]
    %v324 = vld [vmem:[#allocation8 + $0x1c4] sm:$0xf]
    %v325 = vld [vmem:[#allocation8 + $0x1c8] sm:$0xf]
    %v326 = vld [vmem:[#allocation8 + $0x1cc] sm:$0xf]
    %v327 = vld [vmem:[#allocation8 + $0x1d0] sm:$0xf]
    %v328 = vld [vmem:[#allocation8 + $0x1d4] sm:$0xf]
    %v329 = vld [vmem:[#allocation8 + $0x1d8] sm:$0xf]
    %v330 = vld [vmem:[#allocation8 + $0x1dc] sm:$0xf]
    %v331 = vld [vmem:[#allocation8 + $0x1e0] sm:$0xf]
    %v332 = vld [vmem:[#allocation8 + $0x1e4] sm:$0xf]
    %v333 = vld [vmem:[#allocation8 + $0x1e8] sm:$0xf]
    %v334 = vld [vmem:[#allocation8 + $0x1ec] sm:$0xf]
    %v335 = vld [vmem:[#allocation8 + $0x1f0] sm:$0xf]
    %v336 = vld [vmem:[#allocation8 + $0x1f4] sm:$0xf]
    %v337 = vld [vmem:[#allocation8 + $0x1f8] sm:$0xf]
    %v338 = vld [vmem:[#allocation8 + $0x1fc] sm:$0xf]
    %v339 = vld [vmem:[#allocation9] sm:$0x1]
    %v341 = vlaneseq
    %v342 = vshrl.u32 %v341, 7
    %v343 = vsub.s32 0, %v342
    %v344 = vrot.slane %v339, %v343
    %v474 = vunpack.c.l.b16 %v211
    %v475 = vunpack.c.l.b16 %v212
    %v476 = vunpack.c.l.b16 %v213
    %v477 = vunpack.c.l.b16 %v214
    %v478 = vunpack.c.l.b16 %v215
    %v479 = vunpack.c.l.b16 %v216
    %v480 = vunpack.c.l.b16 %v217
    %v481 = vunpack.c.l.b16 %v218
    %v482 = vunpack.c.l.b16 %v219
    %v483 = vunpack.c.l.b16 %v220
    %v484 = vunpack.c.l.b16 %v221
    %v485 = vunpack.c.l.b16 %v222
    %v486 = vunpack.c.l.b16 %v223
    %v487 = vunpack.c.l.b16 %v224
    %v488 = vunpack.c.l.b16 %v225
    %v489 = vunpack.c.l.b16 %v226
    %v490 = vunpack.c.l.b16 %v227
    %v491 = vunpack.c.l.b16 %v228
    %v492 = vunpack.c.l.b16 %v229
    %v493 = vunpack.c.l.b16 %v230
    %v494 = vunpack.c.l.b16 %v231
    %v495 = vunpack.c.l.b16 %v232
    %v496 = vunpack.c.l.b16 %v233
    %v497 = vunpack.c.l.b16 %v234
    %v498 = vunpack.c.l.b16 %v235
    %v499 = vunpack.c.l.b16 %v236
    %v500 = vunpack.c.l.b16 %v237
    %v501 = vunpack.c.l.b16 %v238
    %v502 = vunpack.c.l.b16 %v239
    %v503 = vunpack.c.l.b16 %v240
    %v504 = vunpack.c.l.b16 %v241
    %v505 = vunpack.c.l.b16 %v242
    %v506 = vunpack.c.l.b16 %v243
    %v507 = vunpack.c.l.b16 %v244
    %v508 = vunpack.c.l.b16 %v245
    %v509 = vunpack.c.l.b16 %v246
    %v510 = vunpack.c.l.b16 %v247
    %v511 = vunpack.c.l.b16 %v248
    %v512 = vunpack.c.l.b16 %v249
    %v513 = vunpack.c.l.b16 %v250
    %v514 = vunpack.c.l.b16 %v251
    %v515 = vunpack.c.l.b16 %v252
    %v516 = vunpack.c.l.b16 %v253
    %v517 = vunpack.c.l.b16 %v254
    %v518 = vunpack.c.l.b16 %v255
    %v519 = vunpack.c.l.b16 %v256
    %v520 = vunpack.c.l.b16 %v257
    %v521 = vunpack.c.l.b16 %v258
    %v522 = vunpack.c.l.b16 %v259
    %v523 = vunpack.c.l.b16 %v260
    %v524 = vunpack.c.l.b16 %v261
    %v525 = vunpack.c.l.b16 %v262
    %v526 = vunpack.c.l.b16 %v263
    %v527 = vunpack.c.l.b16 %v264
    %v528 = vunpack.c.l.b16 %v265
    %v529 = vunpack.c.l.b16 %v266
    %v530 = vunpack.c.l.b16 %v267
    %v531 = vunpack.c.l.b16 %v268
    %v532 = vunpack.c.l.b16 %v269
    %v533 = vunpack.c.l.b16 %v270
    %v534 = vunpack.c.l.b16 %v271
    %v535 = vunpack.c.l.b16 %v272
    %v536 = vunpack.c.l.b16 %v273
    %v537 = vunpack.c.l.b16 %v274
    %v538 = vunpack.c.l.b16 %v275
    %v539 = vunpack.c.l.b16 %v276
    %v540 = vunpack.c.l.b16 %v277
    %v541 = vunpack.c.l.b16 %v278
    %v542 = vunpack.c.l.b16 %v279
    %v543 = vunpack.c.l.b16 %v280
    %v544 = vunpack.c.l.b16 %v281
    %v545 = vunpack.c.l.b16 %v282
    %v546 = vunpack.c.l.b16 %v283
    %v547 = vunpack.c.l.b16 %v284
    %v548 = vunpack.c.l.b16 %v285
    %v549 = vunpack.c.l.b16 %v286
    %v550 = vunpack.c.l.b16 %v287
    %v551 = vunpack.c.l.b16 %v288
    %v552 = vunpack.c.l.b16 %v289
    %v553 = vunpack.c.l.b16 %v290
    %v554 = vunpack.c.l.b16 %v291
    %v555 = vunpack.c.l.b16 %v292
    %v556 = vunpack.c.l.b16 %v293
    %v557 = vunpack.c.l.b16 %v294
    %v558 = vunpack.c.l.b16 %v295
    %v559 = vunpack.c.l.b16 %v296
    %v560 = vunpack.c.l.b16 %v297
    %v561 = vunpack.c.l.b16 %v298
    %v562 = vunpack.c.l.b16 %v299
    %v563 = vunpack.c.l.b16 %v300
    %v564 = vunpack.c.l.b16 %v301
    %v565 = vunpack.c.l.b16 %v302
    %v566 = vunpack.c.l.b16 %v303
    %v567 = vunpack.c.l.b16 %v304
    %v568 = vunpack.c.l.b16 %v305
    %v569 = vunpack.c.l.b16 %v306
    %v570 = vunpack.c.l.b16 %v307
    %v571 = vunpack.c.l.b16 %v308
    %v572 = vunpack.c.l.b16 %v309
    %v573 = vunpack.c.l.b16 %v310
    %v574 = vunpack.c.l.b16 %v311
    %v575 = vunpack.c.l.b16 %v312
    %v576 = vunpack.c.l.b16 %v313
    %v577 = vunpack.c.l.b16 %v314
    %v578 = vunpack.c.l.b16 %v315
    %v579 = vunpack.c.l.b16 %v316
    %v580 = vunpack.c.l.b16 %v317
    %v581 = vunpack.c.l.b16 %v318
    %v582 = vunpack.c.l.b16 %v319
    %v583 = vunpack.c.l.b16 %v320
    %v584 = vunpack.c.l.b16 %v321
    %v585 = vunpack.c.l.b16 %v322
    %v586 = vunpack.c.l.b16 %v323
    %v587 = vunpack.c.l.b16 %v324
    %v588 = vunpack.c.l.b16 %v325
    %v589 = vunpack.c.l.b16 %v326
    %v590 = vunpack.c.l.b16 %v327
    %v591 = vunpack.c.l.b16 %v328
    %v592 = vunpack.c.l.b16 %v329
    %v593 = vunpack.c.l.b16 %v330
    %v594 = vunpack.c.l.b16 %v331
    %v595 = vunpack.c.l.b16 %v332
    %v596 = vunpack.c.l.b16 %v333
    %v597 = vunpack.c.l.b16 %v334
    %v598 = vunpack.c.l.b16 %v335
    %v599 = vunpack.c.l.b16 %v336
    %v600 = vunpack.c.l.b16 %v337
    %v601 = vunpack.c.l.b16 %v338
    %v602 = vpack.c.b16 %v475, %v474
    %v603 = vpack.c.b16 %v477, %v476
    %v604 = vpack.c.b16 %v479, %v478
    %v605 = vpack.c.b16 %v481, %v480
    %v606 = vpack.c.b16 %v483, %v482
    %v607 = vpack.c.b16 %v485, %v484
    %v608 = vpack.c.b16 %v487, %v486
    %v609 = vpack.c.b16 %v489, %v488
    %v610 = vpack.c.b16 %v491, %v490
    %v611 = vpack.c.b16 %v493, %v492
    %v612 = vpack.c.b16 %v495, %v494
    %v613 = vpack.c.b16 %v497, %v496
    %v614 = vpack.c.b16 %v499, %v498
    %v615 = vpack.c.b16 %v501, %v500
    %v616 = vpack.c.b16 %v503, %v502
    %v617 = vpack.c.b16 %v505, %v504
    %v618 = vpack.c.b16 %v507, %v506
    %v619 = vpack.c.b16 %v509, %v508
    %v620 = vpack.c.b16 %v511, %v510
    %v621 = vpack.c.b16 %v513, %v512
    %v622 = vpack.c.b16 %v515, %v514
    %v623 = vpack.c.b16 %v517, %v516
    %v624 = vpack.c.b16 %v519, %v518
    %v625 = vpack.c.b16 %v521, %v520
    %v626 = vpack.c.b16 %v523, %v522
    %v627 = vpack.c.b16 %v525, %v524
    %v628 = vpack.c.b16 %v527, %v526
    %v629 = vpack.c.b16 %v529, %v528
    %v630 = vpack.c.b16 %v531, %v530
    %v631 = vpack.c.b16 %v533, %v532
    %v632 = vpack.c.b16 %v535, %v534
    %v633 = vpack.c.b16 %v537, %v536
    %v634 = vpack.c.b16 %v539, %v538
    %v635 = vpack.c.b16 %v541, %v540
    %v636 = vpack.c.b16 %v543, %v542
    %v637 = vpack.c.b16 %v545, %v544
    %v638 = vpack.c.b16 %v547, %v546
    %v639 = vpack.c.b16 %v549, %v548
    %v640 = vpack.c.b16 %v551, %v550
    %v641 = vpack.c.b16 %v553, %v552
    %v642 = vpack.c.b16 %v555, %v554
    %v643 = vpack.c.b16 %v557, %v556
    %v644 = vpack.c.b16 %v559, %v558
    %v645 = vpack.c.b16 %v561, %v560
    %v646 = vpack.c.b16 %v563, %v562
    %v647 = vpack.c.b16 %v565, %v564
    %v648 = vpack.c.b16 %v567, %v566
    %v649 = vpack.c.b16 %v569, %v568
    %v650 = vpack.c.b16 %v571, %v570
    %v651 = vpack.c.b16 %v573, %v572
    %v652 = vpack.c.b16 %v575, %v574
    %v653 = vpack.c.b16 %v577, %v576
    %v654 = vpack.c.b16 %v579, %v578
    %v655 = vpack.c.b16 %v581, %v580
    %v656 = vpack.c.b16 %v583, %v582
    %v657 = vpack.c.b16 %v585, %v584
    %v658 = vpack.c.b16 %v587, %v586
    %v659 = vpack.c.b16 %v589, %v588
    %v660 = vpack.c.b16 %v591, %v590
    %v661 = vpack.c.b16 %v593, %v592
    %v662 = vpack.c.b16 %v595, %v594
    %v663 = vpack.c.b16 %v597, %v596
    %v664 = vpack.c.b16 %v599, %v598
    %v665 = vpack.c.b16 %v601, %v600
    %730 = vmatprep.subr.bf16.mxu0 0
    %731 = vmatpush1.bf16.msra.mxu0 %v602
    %732 = vmatprep.subr.bf16.mxu0 0
    %733 = vmatpush1.bf16.msra.mxu0 %v603
    %734 = vmatprep.subr.bf16.mxu0 0
    %735 = vmatpush1.bf16.msra.mxu0 %v604
    %736 = vmatprep.subr.bf16.mxu0 0
    %737 = vmatpush1.bf16.msra.mxu0 %v605
    %738 = vmatprep.subr.bf16.mxu0 0
    %739 = vmatpush1.bf16.msra.mxu0 %v606
    %740 = vmatprep.subr.bf16.mxu0 0
    %741 = vmatpush1.bf16.msra.mxu0 %v607
    %742 = vmatprep.subr.bf16.mxu0 0
    %743 = vmatpush1.bf16.msra.mxu0 %v608
    %744 = vmatprep.subr.bf16.mxu0 0
    %745 = vmatpush1.bf16.msra.mxu0 %v609
    %746 = vmatprep.subr.bf16.mxu0 0
    %747 = vmatpush1.bf16.msra.mxu0 %v610
    %748 = vmatprep.subr.bf16.mxu0 0
    %749 = vmatpush1.bf16.msra.mxu0 %v611
    %750 = vmatprep.subr.bf16.mxu0 0
    %751 = vmatpush1.bf16.msra.mxu0 %v612
    %752 = vmatprep.subr.bf16.mxu0 0
    %753 = vmatpush1.bf16.msra.mxu0 %v613
    %754 = vmatprep.subr.bf16.mxu0 0
    %755 = vmatpush1.bf16.msra.mxu0 %v614
    %756 = vmatprep.subr.bf16.mxu0 0
    %757 = vmatpush1.bf16.msra.mxu0 %v615
    %758 = vmatprep.subr.bf16.mxu0 0
    %759 = vmatpush1.bf16.msra.mxu0 %v616
    %760 = vmatprep.subr.bf16.mxu0 0
    %761 = vmatpush1.bf16.msra.mxu0 %v617
    %762 = vmatprep.mubr.bf16.mxu0 %v204
    %763 = vmatmul.mubr.bf16.gmra.mrb[0].mxu0 %v203
    %v764 = vpop.f32.mrb[0].mxu0
    %v765 = vadd.f32 %v344, %v764
    %v766 = vpop.f32.mrb[0].mxu0
    %v767 = vpop.f32.mrb[0].mxu0
    %v768 = vadd.f32 %v344, %v767
    %v769 = vpop.f32.mrb[0].mxu0
    %770 = vdwg.mxu0
    %771 = vmatprep.subr.bf16.mxu0 0
    %772 = vmatpush1.bf16.msra.mxu0 %v618
    %773 = vmatprep.subr.bf16.mxu0 0
    %774 = vmatpush1.bf16.msra.mxu0 %v619
    %775 = vmatprep.subr.bf16.mxu0 0
    %776 = vmatpush1.bf16.msra.mxu0 %v620
    %777 = vmatprep.subr.bf16.mxu0 0
    %778 = vmatpush1.bf16.msra.mxu0 %v621
    %779 = vmatprep.subr.bf16.mxu0 0
    %780 = vmatpush1.bf16.msra.mxu0 %v622
    %781 = vmatprep.subr.bf16.mxu0 0
    %782 = vmatpush1.bf16.msra.mxu0 %v623
    %783 = vmatprep.subr.bf16.mxu0 0
    %784 = vmatpush1.bf16.msra.mxu0 %v624
    %785 = vmatprep.subr.bf16.mxu0 0
    %786 = vmatpush1.bf16.msra.mxu0 %v625
    %787 = vmatprep.subr.bf16.mxu0 0
    %788 = vmatpush1.bf16.msra.mxu0 %v626
    %789 = vmatprep.subr.bf16.mxu0 0
    %790 = vmatpush1.bf16.msra.mxu0 %v627
    %791 = vmatprep.subr.bf16.mxu0 0
    %792 = vmatpush1.bf16.msra.mxu0 %v628
    %793 = vmatprep.subr.bf16.mxu0 0
    %794 = vmatpush1.bf16.msra.mxu0 %v629
    %795 = vmatprep.subr.bf16.mxu0 0
    %796 = vmatpush1.bf16.msra.mxu0 %v630
    %797 = vmatprep.subr.bf16.mxu0 0
    %798 = vmatpush1.bf16.msra.mxu0 %v631
    %799 = vmatprep.subr.bf16.mxu0 0
    %800 = vmatpush1.bf16.msra.mxu0 %v632
    %801 = vmatprep.subr.bf16.mxu0 0
    %802 = vmatpush1.bf16.msra.mxu0 %v633
    %803 = vmatprep.mubr.bf16.mxu0 %v206
    %804 = vmatmul.mubr.bf16.gmra.mrb[0].mxu0 %v205
    %v805 = vpop.f32.mrb[0].mxu0
    %v806 = vadd.f32 %v765, %v805
    %v807 = vpop.f32.mrb[0].mxu0
    %v808 = vpop.f32.mrb[0].mxu0
    %v809 = vadd.f32 %v768, %v808
    %v810 = vpop.f32.mrb[0].mxu0
    %811 = vdwg.mxu0
    %812 = vmatprep.subr.bf16.mxu0 0
    %813 = vmatpush1.bf16.msra.mxu0 %v634
    %814 = vmatprep.subr.bf16.mxu0 0
    %815 = vmatpush1.bf16.msra.mxu0 %v635
    %816 = vmatprep.subr.bf16.mxu0 0
    %817 = vmatpush1.bf16.msra.mxu0 %v636
    %818 = vmatprep.subr.bf16.mxu0 0
    %819 = vmatpush1.bf16.msra.mxu0 %v637
    %820 = vmatprep.subr.bf16.mxu0 0
    %821 = vmatpush1.bf16.msra.mxu0 %v638
    %822 = vmatprep.subr.bf16.mxu0 0
    %823 = vmatpush1.bf16.msra.mxu0 %v639
    %824 = vmatprep.subr.bf16.mxu0 0
    %825 = vmatpush1.bf16.msra.mxu0 %v640
    %826 = vmatprep.subr.bf16.mxu0 0
    %827 = vmatpush1.bf16.msra.mxu0 %v641
    %828 = vmatprep.subr.bf16.mxu0 0
    %829 = vmatpush1.bf16.msra.mxu0 %v642
    %830 = vmatprep.subr.bf16.mxu0 0
    %831 = vmatpush1.bf16.msra.mxu0 %v643
    %832 = vmatprep.subr.bf16.mxu0 0
    %833 = vmatpush1.bf16.msra.mxu0 %v644
    %834 = vmatprep.subr.bf16.mxu0 0
    %835 = vmatpush1.bf16.msra.mxu0 %v645
    %836 = vmatprep.subr.bf16.mxu0 0
    %837 = vmatpush1.bf16.msra.mxu0 %v646
    %838 = vmatprep.subr.bf16.mxu0 0
    %839 = vmatpush1.bf16.msra.mxu0 %v647
    %840 = vmatprep.subr.bf16.mxu0 0
    %841 = vmatpush1.bf16.msra.mxu0 %v648
    %842 = vmatprep.subr.bf16.mxu0 0
    %843 = vmatpush1.bf16.msra.mxu0 %v649
    %844 = vmatprep.mubr.bf16.mxu0 %v208
    %845 = vmatmul.mubr.bf16.gmra.mrb[0].mxu0 %v207
    %v846 = vpop.f32.mrb[0].mxu0
    %v847 = vadd.f32 %v806, %v846
    %v848 = vpop.f32.mrb[0].mxu0
    %v849 = vpop.f32.mrb[0].mxu0
    %v850 = vadd.f32 %v809, %v849
    %v851 = vpop.f32.mrb[0].mxu0
    %852 = vdwg.mxu0
    %853 = vmatprep.subr.bf16.mxu0 0
    %854 = vmatpush1.bf16.msra.mxu0 %v650
    %855 = vmatprep.subr.bf16.mxu0 0
    %856 = vmatpush1.bf16.msra.mxu0 %v651
    %857 = vmatprep.subr.bf16.mxu0 0
    %858 = vmatpush1.bf16.msra.mxu0 %v652
    %859 = vmatprep.subr.bf16.mxu0 0
    %860 = vmatpush1.bf16.msra.mxu0 %v653
    %861 = vmatprep.subr.bf16.mxu0 0
    %862 = vmatpush1.bf16.msra.mxu0 %v654
    %863 = vmatprep.subr.bf16.mxu0 0
    %864 = vmatpush1.bf16.msra.mxu0 %v655
    %865 = vmatprep.subr.bf16.mxu0 0
    %866 = vmatpush1.bf16.msra.mxu0 %v656
    %867 = vmatprep.subr.bf16.mxu0 0
    %868 = vmatpush1.bf16.msra.mxu0 %v657
    %869 = vmatprep.subr.bf16.mxu0 0
    %870 = vmatpush1.bf16.msra.mxu0 %v658
    %871 = vmatprep.subr.bf16.mxu0 0
    %872 = vmatpush1.bf16.msra.mxu0 %v659
    %873 = vmatprep.subr.bf16.mxu0 0
    %874 = vmatpush1.bf16.msra.mxu0 %v660
    %875 = vmatprep.subr.bf16.mxu0 0
    %876 = vmatpush1.bf16.msra.mxu0 %v661
    %877 = vmatprep.subr.bf16.mxu0 0
    %878 = vmatpush1.bf16.msra.mxu0 %v662
    %879 = vmatprep.subr.bf16.mxu0 0
    %880 = vmatpush1.bf16.msra.mxu0 %v663
    %881 = vmatprep.subr.bf16.mxu0 0
    %882 = vmatpush1.bf16.msra.mxu0 %v664
    %883 = vmatprep.subr.bf16.mxu0 0
    %884 = vmatpush1.bf16.msra.mxu0 %v665
    %885 = vmatprep.mubr.bf16.mxu0 %v210
    %886 = vmatmul.mubr.bf16.gmra.mrb[0].mxu0 %v209
    %v887 = vpop.f32.mrb[0].mxu0
    %v888 = vadd.f32 %v847, %v887
    %v889 = vpop.f32.mrb[0].mxu0
    %v890 = vpop.f32.mrb[0].mxu0
    %v891 = vadd.f32 %v850, %v890
    %v892 = vpop.f32.mrb[0].mxu0
    %893 = vdwg.mxu0
    %v894 = vmax.f32 %v888, 0.0
    %v895 = vmax.f32 %v891, 0.0
    %v896 = vld [vmem:[#allocation11] sm:$0xff]
    %v897 = vld [vmem:[#allocation11 + $0x8] sm:$0xff]
    %v898 = vld [vmem:[#allocation11 + $0x10] sm:$0xff]
    %v899 = vld [vmem:[#allocation11 + $0x18] sm:$0xff]
    %v900 = vld [vmem:[#allocation12] sm:$0x1]
    %v902 = vlaneseq
    %v903 = vshrl.u32 %v902, 7
    %v904 = vsub.s32 0, %v903
    %v905 = vrot.slane %v900, %v904
    %vm907 = vcmask 261120
    %v909 = vsel %vm907, %v894, 0
    %v912 = vsel %vm907, %v895, 0
    %914 = vmatprep.subr.mxu0 0.0
    %915 = vmatpush1.msra.mxu0 %v896
    %916 = vmatprep.subr.mxu0 0.0
    %917 = vmatpush1.msra.mxu0 %v897
    %918 = vmatprep.subr.mxu0 0.0
    %919 = vmatpush1.msra.mxu0 %v898
    %920 = vmatprep.subr.mxu0 0.0
    %921 = vmatpush1.msra.mxu0 %v899
    %922 = vmatprep.subr.mxu0 0.0
    %923 = vmatpush1.msra.mxu0 0.0
    %924 = vmatprep.subr.mxu0 0.0
    %925 = vmatpush1.msra.mxu0 0.0
    %926 = vmatprep.subr.mxu0 0.0
    %927 = vmatpush1.msra.mxu0 0.0
    %928 = vmatprep.subr.mxu0 0.0
    %929 = vmatpush1.msra.mxu0 0.0
    %930 = vmatprep.subr.mxu0 0.0
    %931 = vmatpush1.msra.mxu0 0.0
    %932 = vmatprep.subr.mxu0 0.0
    %933 = vmatpush1.msra.mxu0 0.0
    %934 = vmatprep.subr.mxu0 0.0
    %935 = vmatpush1.msra.mxu0 0.0
    %936 = vmatprep.subr.mxu0 0.0
    %937 = vmatpush1.msra.mxu0 0.0
    %938 = vmatprep.subr.mxu0 0.0
    %939 = vmatpush1.msra.mxu0 0.0
    %940 = vmatprep.subr.mxu0 0.0
    %941 = vmatpush1.msra.mxu0 0.0
    %942 = vmatprep.subr.mxu0 0.0
    %943 = vmatpush1.msra.mxu0 0.0
    %944 = vmatprep.subr.mxu0 0.0
    %945 = vmatpush1.msra.mxu0 0.0
    %946 = vmatprep.subr.mxu0 0.0
    %947 = vmatpush1.msra.mxu0 0.0
    %948 = vmatprep.subr.mxu0 0.0
    %949 = vmatpush1.msra.mxu0 0.0
    %950 = vmatprep.subr.mxu0 0.0
    %951 = vmatpush1.msra.mxu0 0.0
    %952 = vmatprep.subr.mxu0 0.0
    %953 = vmatpush1.msra.mxu0 0.0
    %954 = vmatprep.subr.mxu0 0.0
    %955 = vmatpush1.msra.mxu0 0.0
    %956 = vmatprep.subr.mxu0 0.0
    %957 = vmatpush1.msra.mxu0 0.0
    %958 = vmatprep.subr.mxu0 0.0
    %959 = vmatpush1.msra.mxu0 0.0
    %960 = vmatprep.subr.mxu0 0.0
    %961 = vmatpush1.msra.mxu0 0.0
    %962 = vmatprep.subr.mxu0 0.0
    %963 = vmatpush1.msra.mxu0 0.0
    %964 = vmatprep.subr.mxu0 0.0
    %965 = vmatpush1.msra.mxu0 0.0
    %966 = vmatprep.subr.mxu0 0.0
    %967 = vmatpush1.msra.mxu0 0.0
    %968 = vmatprep.subr.mxu0 0.0
    %969 = vmatpush1.msra.mxu0 0.0
    %970 = vmatprep.subr.mxu0 0.0
    %971 = vmatpush1.msra.mxu0 0.0
    %972 = vmatprep.subr.mxu0 0.0
    %973 = vmatpush1.msra.mxu0 0.0
    %974 = vmatprep.subr.mxu0 0.0
    %975 = vmatpush1.msra.mxu0 0.0
    %976 = vmatprep.subr.mxu0 0.0
    %977 = vmatpush1.msra.mxu0 0.0
    %978 = vmatprep.mubr.f32.mxu0 0.0
    %979 = vmatmul.mubr.f32.gmra.mrb[0].mxu0 %v909
    %v980 = vpop.f32.mrb[0].mxu0
    %v981 = vadd.f32 %v905, %v980
    %v982 = vpop.f32.mrb[0].mxu0
    %983 = vmatprep.mubr.f32.mxu0 0.0
    %984 = vmatmul.mubr.f32.gmra.mrb[0].mxu0 %v912
    %v985 = vpop.f32.mrb[0].mxu0
    %v986 = vadd.f32 %v905, %v985
    %v987 = vpop.f32.mrb[0].mxu0
    %988 = vdwg.mxu0
    %v989 = vmul.f32 %v981, 0.5
    %v990 = vmul.f32 %v986, 0.5
    %v991 = vmul.f32 %v989, 1.442695
    %v992 = vpow.pop %v991
    %v993 = vmul.f32 %v990, 1.442695
    %v994 = vpow.pop %v993
    %v995 = vld [vmem:[#allocation6] sm:$0xff]
    %v996 = vld [vmem:[#allocation6 + $0x8] sm:$0xff]
    %999 = vrot.lane.b32.xlu0 %v992, 120
    %v1000 = vpop.permute.xlu0 %999
    %1001 = vrot.lane.b32.xlu0 %v994, 120
    %v1002 = vpop.permute.xlu0 %1001
    %v1005 = vmul.f32 %v995, %v1000
    %v1006 = vmul.f32 %v996, %v1002
    %v1007 = vadd.f32 %v981, %v1005
    %v1008 = vadd.f32 %v986, %v1006
    %v1009 = vld [vmem:[#allocation14] sm:$0xff]
    %v1010 = vld [vmem:[#allocation15] sm:$0x1]
    %v1012 = vlaneseq
    %v1013 = vshrl.u32 %v1012, 7
    %v1014 = vsub.s32 0, %v1013
    %v1015 = vrot.slane %v1010, %v1014
    %vm1017 = vcmask 64512
    %v1019 = vsel %vm1017, %v1007, 0
    %v1022 = vsel %vm1017, %v1008, 0
    %1024 = vmatprep.subr.mxu0 0.0
    %1025 = vmatpush1.msra.mxu0 %v1009
    %1026 = vmatprep.subr.mxu0 0.0
    %1027 = vmatpush1.msra.mxu0 0.0
    %1028 = vmatprep.subr.mxu0 0.0
    %1029 = vmatpush1.msra.mxu0 0.0
    %1030 = vmatprep.subr.mxu0 0.0
    %1031 = vmatpush1.msra.mxu0 0.0
    %1032 = vmatprep.subr.mxu0 0.0
    %1033 = vmatpush1.msra.mxu0 0.0
    %1034 = vmatprep.subr.mxu0 0.0
    %1035 = vmatpush1.msra.mxu0 0.0
    %1036 = vmatprep.subr.mxu0 0.0
    %1037 = vmatpush1.msra.mxu0 0.0
    %1038 = vmatprep.subr.mxu0 0.0
    %1039 = vmatpush1.msra.mxu0 0.0
    %1040 = vmatprep.subr.mxu0 0.0
    %1041 = vmatpush1.msra.mxu0 0.0
    %1042 = vmatprep.subr.mxu0 0.0
    %1043 = vmatpush1.msra.mxu0 0.0
    %1044 = vmatprep.subr.mxu0 0.0
    %1045 = vmatpush1.msra.mxu0 0.0
    %1046 = vmatprep.subr.mxu0 0.0
    %1047 = vmatpush1.msra.mxu0 0.0
    %1048 = vmatprep.subr.mxu0 0.0
    %1049 = vmatpush1.msra.mxu0 0.0
    %1050 = vmatprep.subr.mxu0 0.0
    %1051 = vmatpush1.msra.mxu0 0.0
    %1052 = vmatprep.subr.mxu0 0.0
    %1053 = vmatpush1.msra.mxu0 0.0
    %1054 = vmatprep.subr.mxu0 0.0
    %1055 = vmatpush1.msra.mxu0 0.0
    %1056 = vmatprep.subr.mxu0 0.0
    %1057 = vmatpush1.msra.mxu0 0.0
    %1058 = vmatprep.subr.mxu0 0.0
    %1059 = vmatpush1.msra.mxu0 0.0
    %1060 = vmatprep.subr.mxu0 0.0
    %1061 = vmatpush1.msra.mxu0 0.0
    %1062 = vmatprep.subr.mxu0 0.0
    %1063 = vmatpush1.msra.mxu0 0.0
    %1064 = vmatprep.subr.mxu0 0.0
    %1065 = vmatpush1.msra.mxu0 0.0
    %1066 = vmatprep.subr.mxu0 0.0
    %1067 = vmatpush1.msra.mxu0 0.0
    %1068 = vmatprep.subr.mxu0 0.0
    %1069 = vmatpush1.msra.mxu0 0.0
    %1070 = vmatprep.subr.mxu0 0.0
    %1071 = vmatpush1.msra.mxu0 0.0
    %1072 = vmatprep.subr.mxu0 0.0
    %1073 = vmatpush1.msra.mxu0 0.0
    %1074 = vmatprep.subr.mxu0 0.0
    %1075 = vmatpush1.msra.mxu0 0.0
    %1076 = vmatprep.subr.mxu0 0.0
    %1077 = vmatpush1.msra.mxu0 0.0
    %1078 = vmatprep.subr.mxu0 0.0
    %1079 = vmatpush1.msra.mxu0 0.0
    %1080 = vmatprep.subr.mxu0 0.0
    %1081 = vmatpush1.msra.mxu0 0.0
    %1082 = vmatprep.subr.mxu0 0.0
    %1083 = vmatpush1.msra.mxu0 0.0
    %1084 = vmatprep.subr.mxu0 0.0
    %1085 = vmatpush1.msra.mxu0 0.0
    %1086 = vmatprep.subr.mxu0 0.0
    %1087 = vmatpush1.msra.mxu0 0.0
    %1088 = vmatprep.mubr.f32.mxu0 0.0
    %1089 = vmatmul.mubr.f32.gmra.mrb[0].mxu0 %v1019
    %v1090 = vpop.f32.mrb[0].mxu0
    %v1091 = vadd.f32 %v1015, %v1090
    %v1092 = vpop.f32.mrb[0].mxu0
    %1093 = vmatprep.mubr.f32.mxu0 0.0
    %1094 = vmatmul.mubr.f32.gmra.mrb[0].mxu0 %v1022
    %v1095 = vpop.f32.mrb[0].mxu0
    %v1096 = vadd.f32 %v1015, %v1095
    %v1097 = vpop.f32.mrb[0].mxu0
    %1098 = vdwg.mxu0
    %v1099 = vmax.f32 %v1091, 0.0
    %v1100 = vmax.f32 %v1096, 0.0
    %v1101 = vld [vmem:[#allocation17] sm:$0xff]
    %v1102 = vld [vmem:[#allocation17 + $0x8] sm:$0xff]
    %v1103 = vld [vmem:[#allocation2] sm:$0x1]
    %v1105 = vlaneseq
    %v1106 = vshrl.u32 %v1105, 7
    %v1107 = vsub.s32 0, %v1106
    %v1108 = vrot.slane %v1103, %v1107
    %1112 = vrot.lane.b32.xlu0 %v1099, 96
    %v1113 = vpop.permute.xlu0 %1112
    %1114 = vrot.lane.b32.xlu0 %v1100, 96
    %v1115 = vpop.permute.xlu0 %1114
    %vm1116 = vcmask 130048
    %v1117 = vsel %vm1116, %v1113, 0
    %v1119 = vsel %vm1116, %v1115, 0
    %1121 = vmatprep.subr.mxu0 0.0
    %1122 = vmatpush1.msra.mxu0 %v1101
    %1123 = vmatprep.subr.mxu0 0.0
    %1124 = vmatpush1.msra.mxu0 %v1102
    %1125 = vmatprep.subr.mxu0 0.0
    %1126 = vmatpush1.msra.mxu0 0.0
    %1127 = vmatprep.subr.mxu0 0.0
    %1128 = vmatpush1.msra.mxu0 0.0
    %1129 = vmatprep.subr.mxu0 0.0
    %1130 = vmatpush1.msra.mxu0 0.0
    %1131 = vmatprep.subr.mxu0 0.0
    %1132 = vmatpush1.msra.mxu0 0.0
    %1133 = vmatprep.subr.mxu0 0.0
    %1134 = vmatpush1.msra.mxu0 0.0
    %1135 = vmatprep.subr.mxu0 0.0
    %1136 = vmatpush1.msra.mxu0 0.0
    %1137 = vmatprep.subr.mxu0 0.0
    %1138 = vmatpush1.msra.mxu0 0.0
    %1139 = vmatprep.subr.mxu0 0.0
    %1140 = vmatpush1.msra.mxu0 0.0
    %1141 = vmatprep.subr.mxu0 0.0
    %1142 = vmatpush1.msra.mxu0 0.0
    %1143 = vmatprep.subr.mxu0 0.0
    %1144 = vmatpush1.msra.mxu0 0.0
    %1145 = vmatprep.subr.mxu0 0.0
    %1146 = vmatpush1.msra.mxu0 0.0
    %1147 = vmatprep.subr.mxu0 0.0
    %1148 = vmatpush1.msra.mxu0 0.0
    %1149 = vmatprep.subr.mxu0 0.0
    %1150 = vmatpush1.msra.mxu0 0.0
    %1151 = vmatprep.subr.mxu0 0.0
    %1152 = vmatpush1.msra.mxu0 0.0
    %1153 = vmatprep.subr.mxu0 0.0
    %1154 = vmatpush1.msra.mxu0 0.0
    %1155 = vmatprep.subr.mxu0 0.0
    %1156 = vmatpush1.msra.mxu0 0.0
    %1157 = vmatprep.subr.mxu0 0.0
    %1158 = vmatpush1.msra.mxu0 0.0
    %1159 = vmatprep.subr.mxu0 0.0
    %1160 = vmatpush1.msra.mxu0 0.0
    %1161 = vmatprep.subr.mxu0 0.0
    %1162 = vmatpush1.msra.mxu0 0.0
    %1163 = vmatprep.subr.mxu0 0.0
    %1164 = vmatpush1.msra.mxu0 0.0
    %1165 = vmatprep.subr.mxu0 0.0
    %1166 = vmatpush1.msra.mxu0 0.0
    %1167 = vmatprep.subr.mxu0 0.0
    %1168 = vmatpush1.msra.mxu0 0.0
    %1169 = vmatprep.subr.mxu0 0.0
    %1170 = vmatpush1.msra.mxu0 0.0
    %1171 = vmatprep.subr.mxu0 0.0
    %1172 = vmatpush1.msra.mxu0 0.0
    %1173 = vmatprep.subr.mxu0 0.0
    %1174 = vmatpush1.msra.mxu0 0.0
    %1175 = vmatprep.subr.mxu0 0.0
    %1176 = vmatpush1.msra.mxu0 0.0
    %1177 = vmatprep.subr.mxu0 0.0
    %1178 = vmatpush1.msra.mxu0 0.0
    %1179 = vmatprep.subr.mxu0 0.0
    %1180 = vmatpush1.msra.mxu0 0.0
    %1181 = vmatprep.subr.mxu0 0.0
    %1182 = vmatpush1.msra.mxu0 0.0
    %1183 = vmatprep.subr.mxu0 0.0
    %1184 = vmatpush1.msra.mxu0 0.0
    %1185 = vmatprep.mubr.f32.mxu0 0.0
    %1186 = vmatmul.mubr.f32.gmra.mrb[0].mxu0 %v1117
    %v1187 = vpop.f32.mrb[0].mxu0
    %v1188 = vadd.f32 %v1108, %v1187
    %v1189 = vpop.f32.mrb[0].mxu0
    %1190 = vmatprep.mubr.f32.mxu0 0.0
    %1191 = vmatmul.mubr.f32.gmra.mrb[0].mxu0 %v1119
    %v1192 = vpop.f32.mrb[0].mxu0
    %v1193 = vadd.f32 %v1108, %v1192
    %v1194 = vpop.f32.mrb[0].mxu0
    %1195 = vdwg.mxu0
    %v1196 = vpack.c.bf16 %v1100, %v1099
    %v1197 = vld [vmem:[#allocation18] sm:$0xff]
    %v1198 = vld [vmem:[#allocation18 + $0x8] sm:$0xff]
    %v1199 = vld [vmem:[#allocation18 + $0x10] sm:$0xff]
    %v1200 = vld [vmem:[#allocation18 + $0x18] sm:$0xff]
    %v1201 = vld [vmem:[#allocation18 + $0x20] sm:$0xff]
    %v1202 = vld [vmem:[#allocation18 + $0x28] sm:$0xff]
    %v1203 = vld [vmem:[#allocation18 + $0x30] sm:$0xff]
    %v1204 = vld [vmem:[#allocation18 + $0x38] sm:$0xff]
    %v1205 = vld [vmem:[#allocation18 + $0x40] sm:$0xff]
    %v1206 = vld [vmem:[#allocation18 + $0x48] sm:$0xff]
    %v1207 = vld [vmem:[#allocation18 + $0x50] sm:$0xff]
    %v1208 = vld [vmem:[#allocation18 + $0x58] sm:$0xff]
    %v1209 = vld [vmem:[#allocation18 + $0x60] sm:$0xff]
    %v1210 = vld [vmem:[#allocation18 + $0x68] sm:$0xff]
    %v1211 = vld [vmem:[#allocation18 + $0x70] sm:$0xff]
    %v1212 = vld [vmem:[#allocation18 + $0x78] sm:$0xff]
    %v1213 = vld [vmem:[#allocation20] sm:$0xff]
    %v1215 = vlaneseq
    %v1216 = vshrl.u32 %v1215, 7
    %v1217 = vsub.s32 0, %v1216
    %v1218 = vrot.slane %v1213, %v1217
    %v1219 = vlaneseq
    %v1220 = vshrl.u32 %v1219, 7
    %v1221 = vsub.s32 1, %v1220
    %v1222 = vrot.slane %v1213, %v1221
    %v1223 = vlaneseq
    %v1224 = vshrl.u32 %v1223, 7
    %v1225 = vsub.s32 2, %v1224
    %v1226 = vrot.slane %v1213, %v1225
    %v1227 = vlaneseq
    %v1228 = vshrl.u32 %v1227, 7
    %v1229 = vsub.s32 3, %v1228
    %v1230 = vrot.slane %v1213, %v1229
    %v1231 = vlaneseq
    %v1232 = vshrl.u32 %v1231, 7
    %v1233 = vsub.s32 4, %v1232
    %v1234 = vrot.slane %v1213, %v1233
    %v1235 = vlaneseq
    %v1236 = vshrl.u32 %v1235, 7
    %v1237 = vsub.s32 5, %v1236
    %v1238 = vrot.slane %v1213, %v1237
    %v1239 = vlaneseq
    %v1240 = vshrl.u32 %v1239, 7
    %v1241 = vsub.s32 6, %v1240
    %v1242 = vrot.slane %v1213, %v1241
    %v1243 = vlaneseq
    %v1244 = vshrl.u32 %v1243, 7
    %v1245 = vsub.s32 7, %v1244
    %v1246 = vrot.slane %v1213, %v1245
    %v1271 = vunpack.c.l.b16 %v1197
    %v1272 = vunpack.c.h.b16 %v1197
    %v1273 = vunpack.c.l.b16 %v1198
    %v1274 = vunpack.c.h.b16 %v1198
    %v1275 = vunpack.c.l.b16 %v1199
    %v1276 = vunpack.c.h.b16 %v1199
    %v1277 = vunpack.c.l.b16 %v1200
    %v1278 = vunpack.c.h.b16 %v1200
    %v1279 = vunpack.c.l.b16 %v1201
    %v1280 = vunpack.c.h.b16 %v1201
    %v1281 = vunpack.c.l.b16 %v1202
    %v1282 = vunpack.c.h.b16 %v1202
    %v1283 = vunpack.c.l.b16 %v1203
    %v1284 = vunpack.c.h.b16 %v1203
    %v1285 = vunpack.c.l.b16 %v1204
    %v1286 = vunpack.c.h.b16 %v1204
    %v1287 = vunpack.c.l.b16 %v1205
    %v1288 = vunpack.c.h.b16 %v1205
    %v1289 = vunpack.c.l.b16 %v1206
    %v1290 = vunpack.c.h.b16 %v1206
    %v1291 = vunpack.c.l.b16 %v1207
    %v1292 = vunpack.c.h.b16 %v1207
    %v1293 = vunpack.c.l.b16 %v1208
    %v1294 = vunpack.c.h.b16 %v1208
    %v1295 = vunpack.c.l.b16 %v1209
    %v1296 = vunpack.c.h.b16 %v1209
    %v1297 = vunpack.c.l.b16 %v1210
    %v1298 = vunpack.c.h.b16 %v1210
    %v1299 = vunpack.c.l.b16 %v1211
    %v1300 = vunpack.c.h.b16 %v1211
    %v1301 = vunpack.c.l.b16 %v1212
    %v1302 = vunpack.c.h.b16 %v1212
    %v1303 = vpack.c.b16 %v1279, %v1271
    %v1304 = vpack.c.b16 %v1280, %v1272
    %v1305 = vpack.c.b16 %v1281, %v1273
    %v1306 = vpack.c.b16 %v1282, %v1274
    %v1307 = vpack.c.b16 %v1283, %v1275
    %v1308 = vpack.c.b16 %v1284, %v1276
    %v1309 = vpack.c.b16 %v1285, %v1277
    %v1310 = vpack.c.b16 %v1286, %v1278
    %v1311 = vpack.c.b16 %v1295, %v1287
    %v1312 = vpack.c.b16 %v1296, %v1288
    %v1313 = vpack.c.b16 %v1297, %v1289
    %v1314 = vpack.c.b16 %v1298, %v1290
    %v1315 = vpack.c.b16 %v1299, %v1291
    %v1316 = vpack.c.b16 %v1300, %v1292
    %v1317 = vpack.c.b16 %v1301, %v1293
    %v1318 = vpack.c.b16 %v1302, %v1294
    %v1336 = vsel %vm907, %v1196, 0
    %1338 = vmatprep.subr.bf16.mxu0 %v1304
    %1339 = vmatpush1.bf16.msra.mxu0 %v1303
    %1340 = vmatprep.subr.bf16.mxu0 %v1312
    %1341 = vmatpush1.bf16.msra.mxu0 %v1311
    %1342 = vmatprep.subr.bf16.mxu0 0
    %1343 = vmatpush1.bf16.msra.mxu0 0
    %1344 = vmatprep.subr.bf16.mxu0 0
    %1345 = vmatpush1.bf16.msra.mxu0 0
    %1346 = vmatprep.subr.bf16.mxu0 0
    %1347 = vmatpush1.bf16.msra.mxu0 0
    %1348 = vmatprep.subr.bf16.mxu0 0
    %1349 = vmatpush1.bf16.msra.mxu0 0
    %1350 = vmatprep.subr.bf16.mxu0 0
    %1351 = vmatpush1.bf16.msra.mxu0 0
    %1352 = vmatprep.subr.bf16.mxu0 0
    %1353 = vmatpush1.bf16.msra.mxu0 0
    %1354 = vmatprep.subr.bf16.mxu0 0
    %1355 = vmatpush1.bf16.msra.mxu0 0
    %1356 = vmatprep.subr.bf16.mxu0 0
    %1357 = vmatpush1.bf16.msra.mxu0 0
    %1358 = vmatprep.subr.bf16.mxu0 0
    %1359 = vmatpush1.bf16.msra.mxu0 0
    %1360 = vmatprep.subr.bf16.mxu0 0
    %1361 = vmatpush1.bf16.msra.mxu0 0
    %1362 = vmatprep.subr.bf16.mxu0 0
    %1363 = vmatpush1.bf16.msra.mxu0 0
    %1364 = vmatprep.subr.bf16.mxu0 0
    %1365 = vmatpush1.bf16.msra.mxu0 0
    %1366 = vmatprep.subr.bf16.mxu0 0
    %1367 = vmatpush1.bf16.msra.mxu0 0
    %1368 = vmatprep.subr.bf16.mxu0 0
    %1369 = vmatpush1.bf16.msra.mxu0 0
    %1370 = vmatprep.mubr.bf16.mxu0 0
    %1371 = vmatmul.mubr.bf16.gmra.mrb[0].mxu0 %v1336
    %v1372 = vpop.f32.mrb[0].mxu0
    %v1373 = vadd.f32 %v1218, %v1372
    %v1374 = vpop.f32.mrb[0].mxu0
    %v1375 = vadd.f32 %v1222, %v1374
    %v1376 = vpop.f32.mrb[0].mxu0
    %v1377 = vadd.f32 %v1218, %v1376
    %v1378 = vpop.f32.mrb[0].mxu0
    %v1379 = vadd.f32 %v1222, %v1378
    %1380 = vdwg.mxu0
    %1381 = vmatprep.subr.bf16.mxu0 %v1306
    %1382 = vmatpush1.bf16.msra.mxu0 %v1305
    %1383 = vmatprep.subr.bf16.mxu0 %v1314
    %1384 = vmatpush1.bf16.msra.mxu0 %v1313
    %1385 = vmatprep.subr.bf16.mxu0 0
    %1386 = vmatpush1.bf16.msra.mxu0 0
    %1387 = vmatprep.subr.bf16.mxu0 0
    %1388 = vmatpush1.bf16.msra.mxu0 0
    %1389 = vmatprep.subr.bf16.mxu0 0
    %1390 = vmatpush1.bf16.msra.mxu0 0
    %1391 = vmatprep.subr.bf16.mxu0 0
    %1392 = vmatpush1.bf16.msra.mxu0 0
    %1393 = vmatprep.subr.bf16.mxu0 0
    %1394 = vmatpush1.bf16.msra.mxu0 0
    %1395 = vmatprep.subr.bf16.mxu0 0
    %1396 = vmatpush1.bf16.msra.mxu0 0
    %1397 = vmatprep.subr.bf16.mxu0 0
    %1398 = vmatpush1.bf16.msra.mxu0 0
    %1399 = vmatprep.subr.bf16.mxu0 0
    %1400 = vmatpush1.bf16.msra.mxu0 0
    %1401 = vmatprep.subr.bf16.mxu0 0
    %1402 = vmatpush1.bf16.msra.mxu0 0
    %1403 = vmatprep.subr.bf16.mxu0 0
    %1404 = vmatpush1.bf16.msra.mxu0 0
    %1405 = vmatprep.subr.bf16.mxu0 0
    %1406 = vmatpush1.bf16.msra.mxu0 0
    %1407 = vmatprep.subr.bf16.mxu0 0
    %1408 = vmatpush1.bf16.msra.mxu0 0
    %1409 = vmatprep.subr.bf16.mxu0 0
    %1410 = vmatpush1.bf16.msra.mxu0 0
    %1411 = vmatprep.subr.bf16.mxu0 0
    %1412 = vmatpush1.bf16.msra.mxu0 0
    %1413 = vmatprep.mubr.bf16.mxu0 0
    %1414 = vmatmul.mubr.bf16.gmra.mrb[0].mxu0 %v1336
    %v1415 = vpop.f32.mrb[0].mxu0
    %v1416 = vadd.f32 %v1226, %v1415
    %v1417 = vpop.f32.mrb[0].mxu0
    %v1418 = vadd.f32 %v1230, %v1417
    %v1419 = vpop.f32.mrb[0].mxu0
    %v1420 = vadd.f32 %v1226, %v1419
    %v1421 = vpop.f32.mrb[0].mxu0
    %v1422 = vadd.f32 %v1230, %v1421
    %1423 = vdwg.mxu0
    %1424 = vmatprep.subr.bf16.mxu0 %v1308
    %1425 = vmatpush1.bf16.msra.mxu0 %v1307
    %1426 = vmatprep.subr.bf16.mxu0 %v1316
    %1427 = vmatpush1.bf16.msra.mxu0 %v1315
    %1428 = vmatprep.subr.bf16.mxu0 0
    %1429 = vmatpush1.bf16.msra.mxu0 0
    %1430 = vmatprep.subr.bf16.mxu0 0
    %1431 = vmatpush1.bf16.msra.mxu0 0
    %1432 = vmatprep.subr.bf16.mxu0 0
    %1433 = vmatpush1.bf16.msra.mxu0 0
    %1434 = vmatprep.subr.bf16.mxu0 0
    %1435 = vmatpush1.bf16.msra.mxu0 0
    %1436 = vmatprep.subr.bf16.mxu0 0
    %1437 = vmatpush1.bf16.msra.mxu0 0
    %1438 = vmatprep.subr.bf16.mxu0 0
    %1439 = vmatpush1.bf16.msra.mxu0 0
    %1440 = vmatprep.subr.bf16.mxu0 0
    %1441 = vmatpush1.bf16.msra.mxu0 0
    %1442 = vmatprep.subr.bf16.mxu0 0
    %1443 = vmatpush1.bf16.msra.mxu0 0
    %1444 = vmatprep.subr.bf16.mxu0 0
    %1445 = vmatpush1.bf16.msra.mxu0 0
    %1446 = vmatprep.subr.bf16.mxu0 0
    %1447 = vmatpush1.bf16.msra.mxu0 0
    %1448 = vmatprep.subr.bf16.mxu0 0
    %1449 = vmatpush1.bf16.msra.mxu0 0
    %1450 = vmatprep.subr.bf16.mxu0 0
    %1451 = vmatpush1.bf16.msra.mxu0 0
    %1452 = vmatprep.subr.bf16.mxu0 0
    %1453 = vmatpush1.bf16.msra.mxu0 0
    %1454 = vmatprep.subr.bf16.mxu0 0
    %1455 = vmatpush1.bf16.msra.mxu0 0
    %1456 = vmatprep.mubr.bf16.mxu0 0
    %1457 = vmatmul.mubr.bf16.gmra.mrb[0].mxu0 %v1336
    %v1458 = vpop.f32.mrb[0].mxu0
    %v1459 = vadd.f32 %v1234, %v1458
    %v1460 = vpop.f32.mrb[0].mxu0
    %v1461 = vadd.f32 %v1238, %v1460
    %v1462 = vpop.f32.mrb[0].mxu0
    %v1463 = vadd.f32 %v1234, %v1462
    %v1464 = vpop.f32.mrb[0].mxu0
    %v1465 = vadd.f32 %v1238, %v1464
    %1466 = vdwg.mxu0
    %1467 = vmatprep.subr.bf16.mxu0 %v1310
    %1468 = vmatpush1.bf16.msra.mxu0 %v1309
    %1469 = vmatprep.subr.bf16.mxu0 %v1318
    %1470 = vmatpush1.bf16.msra.mxu0 %v1317
    %1471 = vmatprep.subr.bf16.mxu0 0
    %1472 = vmatpush1.bf16.msra.mxu0 0
    %1473 = vmatprep.subr.bf16.mxu0 0
    %1474 = vmatpush1.bf16.msra.mxu0 0
    %1475 = vmatprep.subr.bf16.mxu0 0
    %1476 = vmatpush1.bf16.msra.mxu0 0
    %1477 = vmatprep.subr.bf16.mxu0 0
    %1478 = vmatpush1.bf16.msra.mxu0 0
    %1479 = vmatprep.subr.bf16.mxu0 0
    %1480 = vmatpush1.bf16.msra.mxu0 0
    %1481 = vmatprep.subr.bf16.mxu0 0
    %1482 = vmatpush1.bf16.msra.mxu0 0
    %1483 = vmatprep.subr.bf16.mxu0 0
    %1484 = vmatpush1.bf16.msra.mxu0 0
    %1485 = vmatprep.subr.bf16.mxu0 0
    %1486 = vmatpush1.bf16.msra.mxu0 0
    %1487 = vmatprep.subr.bf16.mxu0 0
    %1488 = vmatpush1.bf16.msra.mxu0 0
    %1489 = vmatprep.subr.bf16.mxu0 0
    %1490 = vmatpush1.bf16.msra.mxu0 0
    %1491 = vmatprep.subr.bf16.mxu0 0
    %1492 = vmatpush1.bf16.msra.mxu0 0
    %1493 = vmatprep.subr.bf16.mxu0 0
    %1494 = vmatpush1.bf16.msra.mxu0 0
    %1495 = vmatprep.subr.bf16.mxu0 0
    %1496 = vmatpush1.bf16.msra.mxu0 0
    %1497 = vmatprep.subr.bf16.mxu0 0
    %1498 = vmatpush1.bf16.msra.mxu0 0
    %1499 = vmatprep.mubr.bf16.mxu0 0
    %1500 = vmatmul.mubr.bf16.gmra.mrb[0].mxu0 %v1336
    %v1501 = vpop.f32.mrb[0].mxu0
    %v1502 = vadd.f32 %v1242, %v1501
    %v1503 = vpop.f32.mrb[0].mxu0
    %v1504 = vadd.f32 %v1246, %v1503
    %v1505 = vpop.f32.mrb[0].mxu0
    %v1506 = vadd.f32 %v1242, %v1505
    %v1507 = vpop.f32.mrb[0].mxu0
    %v1508 = vadd.f32 %v1246, %v1507
    %1509 = vdwg.mxu0
    %v1510 = vmul.f32 %v1373, 0.5
    %v1511 = vmul.f32 %v1375, 0.5
    %v1512 = vmul.f32 %v1416, 0.5
    %v1513 = vmul.f32 %v1418, 0.5
    %v1514 = vmul.f32 %v1459, 0.5
    %v1515 = vmul.f32 %v1461, 0.5
    %v1516 = vmul.f32 %v1502, 0.5
    %v1517 = vmul.f32 %v1504, 0.5
    %v1518 = vmul.f32 %v1377, 0.5
    %v1519 = vmul.f32 %v1379, 0.5
    %v1520 = vmul.f32 %v1420, 0.5
    %v1521 = vmul.f32 %v1422, 0.5
    %v1522 = vmul.f32 %v1463, 0.5
    %v1523 = vmul.f32 %v1465, 0.5
    %v1524 = vmul.f32 %v1506, 0.5
    %v1525 = vmul.f32 %v1508, 0.5
    %v1526 = vtanh.pop %v1510
    %v1527 = vtanh.pop %v1511
    %v1528 = vtanh.pop %v1512
    %v1529 = vtanh.pop %v1513
    %v1530 = vtanh.pop %v1514
    %v1531 = vtanh.pop %v1515
    %v1532 = vtanh.pop %v1516
    %v1533 = vtanh.pop %v1517
    %v1534 = vtanh.pop %v1518
    %v1535 = vtanh.pop %v1519
    %v1536 = vtanh.pop %v1520
    %v1537 = vtanh.pop %v1521
    %v1538 = vtanh.pop %v1522
    %v1539 = vtanh.pop %v1523
    %v1540 = vtanh.pop %v1524
    %v1541 = vtanh.pop %v1525
    %v1542 = vmul.f32 %v1526, 0.5
    %v1543 = vmul.f32 %v1527, 0.5
    %v1544 = vmul.f32 %v1528, 0.5
    %v1545 = vmul.f32 %v1529, 0.5
    %v1546 = vmul.f32 %v1530, 0.5
    %v1547 = vmul.f32 %v1531, 0.5
    %v1548 = vmul.f32 %v1532, 0.5
    %v1549 = vmul.f32 %v1533, 0.5
    %v1550 = vmul.f32 %v1534, 0.5
    %v1551 = vmul.f32 %v1535, 0.5
    %v1552 = vmul.f32 %v1536, 0.5
    %v1553 = vmul.f32 %v1537, 0.5
    %v1554 = vmul.f32 %v1538, 0.5
    %v1555 = vmul.f32 %v1539, 0.5
    %v1556 = vmul.f32 %v1540, 0.5
    %v1557 = vmul.f32 %v1541, 0.5
    %v1558 = vadd.f32 %v1542, 0.5
    %v1559 = vadd.f32 %v1543, 0.5
    %v1560 = vadd.f32 %v1544, 0.5
    %v1561 = vadd.f32 %v1545, 0.5
    %v1562 = vadd.f32 %v1546, 0.5
    %v1563 = vadd.f32 %v1547, 0.5
    %v1564 = vadd.f32 %v1548, 0.5
    %v1565 = vadd.f32 %v1549, 0.5
    %v1566 = vadd.f32 %v1550, 0.5
    %v1567 = vadd.f32 %v1551, 0.5
    %v1568 = vadd.f32 %v1552, 0.5
    %v1569 = vadd.f32 %v1553, 0.5
    %v1570 = vadd.f32 %v1554, 0.5
    %v1571 = vadd.f32 %v1555, 0.5
    %v1572 = vadd.f32 %v1556, 0.5
    %v1573 = vadd.f32 %v1557, 0.5
    %v1574 = vpack.c.bf16 %v1566, %v1558
    %v1575 = vpack.c.bf16 %v1567, %v1559
    %v1576 = vpack.c.bf16 %v1568, %v1560
    %v1577 = vpack.c.bf16 %v1569, %v1561
    %v1578 = vpack.c.bf16 %v1570, %v1562
    %v1579 = vpack.c.bf16 %v1571, %v1563
    %v1580 = vpack.c.bf16 %v1572, %v1564
    %v1581 = vpack.c.bf16 %v1573, %v1565
    %v1590 = vunpack.c.l.b16 %v1574
    %v1591 = vunpack.c.l.b16 %v1575
    %v1592 = vunpack.c.l.b16 %v1576
    %v1593 = vunpack.c.l.b16 %v1577
    %v1594 = vunpack.c.l.b16 %v1578
    %v1595 = vunpack.c.l.b16 %v1579
    %v1596 = vunpack.c.l.b16 %v1580
    %v1597 = vunpack.c.l.b16 %v1581
    %v1598 = vunpack.c.h.b16 %v1574
    %v1599 = vunpack.c.h.b16 %v1575
    %v1600 = vunpack.c.h.b16 %v1576
    %v1601 = vunpack.c.h.b16 %v1577
    %v1602 = vunpack.c.h.b16 %v1578
    %v1603 = vunpack.c.h.b16 %v1579
    %v1604 = vunpack.c.h.b16 %v1580
    %v1605 = vunpack.c.h.b16 %v1581
    %v1606 = vpack.c.b16 %v1591, %v1590
    %v1607 = vpack.c.b16 %v1593, %v1592
    %v1608 = vpack.c.b16 %v1595, %v1594
    %v1609 = vpack.c.b16 %v1597, %v1596
    %v1610 = vpack.c.b16 %v1599, %v1598
    %v1611 = vpack.c.b16 %v1601, %v1600
    %v1612 = vpack.c.b16 %v1603, %v1602
    %v1613 = vpack.c.b16 %v1605, %v1604
    %1622 = vst [vmem:[#allocation21] sm:$0xff] %v1606
    %1623 = vst [vmem:[#allocation21 + $0x8] sm:$0xff] %v1607
    %1624 = vst [vmem:[#allocation21 + $0x10] sm:$0xff] %v1608
    %1625 = vst [vmem:[#allocation21 + $0x18] sm:$0xff] %v1609
    %1626 = vst [vmem:[#allocation21 + $0x20] sm:$0xff] %v1610
    %1627 = vst [vmem:[#allocation21 + $0x28] sm:$0xff] %v1611
    %1628 = vst [vmem:[#allocation21 + $0x30] sm:$0xff] %v1612
    %1629 = vst [vmem:[#allocation21 + $0x38] sm:$0xff] %v1613
    %1632 = vrot.lane.b32.xlu0 %v1188, 16
    %v1633 = vpop.permute.xlu0 %1632
    %1634 = vrot.lane.b32.xlu0 %v1193, 16
    %v1635 = vpop.permute.xlu0 %1634
    %v1638 = vsel %vm1116, %v981, %v1633
    %v1639 = vsel %vm1116, %v986, %v1635
    %vm1640 = vcmask 138240
    %v1641 = vsel %vm1640, %v1638, 0.0
    %v1642 = vsel %vm1640, %v1639, 0.0
    %1643 = vst [vmem:[#allocation22] sm:$0xff] %v1641
    %1644 = vst [vmem:[#allocation22 + $0x8] sm:$0xff] %v1642
    // Predicated region
    $region94: #{_lambda_.1} parent=1 // pred_check
      _
    $region95: #{_lambda_.1} parent=1 // pred_check_branch
      %1646 = sbr.rel (0) target = $region97
    $region96: #{_lambda_.1} parent=1 // pred_region
      %s1648 = ssub.s32 1024, 1024
      %1649 = vsyncadd [#allocation5], %s1648
      %s1650 = sshll.u32 [#allocation21], 4
      %s1651 = int_to_ptr.vmem [resolvable:$true] %s1650
      %1656 = dma.vmem_to_hbm [thread:$0]  %s1651, 1024, %s12, [#allocation5], 512, 512, 32
    $region97: #{_lambda_.1} parent=1 // pred_fallthru
      _
    // Predicated region
    $region98: #{_lambda_.1} parent=1 // pred_check
      _
    $region99: #{_lambda_.1} parent=1 // pred_check_branch
      %1658 = sbr.rel (0) target = $region101
    $region100: #{_lambda_.1} parent=1 // pred_region
      %s1660 = ssub.s32 256, 256
      %1661 = vsyncadd [#allocation23], %s1660
      %s1662 = sshll.u32 [#allocation22], 4
      %s1663 = int_to_ptr.vmem [resolvable:$true] %s1662
      %1668 = dma.vmem_to_hbm [thread:$0]  %s1663, 256, %s13, [#allocation23], 128, 128, 8
    $region101: #{_lambda_.1} parent=1 // pred_fallthru
      _
    // Predicated region
    $region102: #{_lambda_.1} parent=1 // pred_check
      _
    $region103: #{_lambda_.1} parent=1 // pred_check_branch
      %1670 = sbr.rel (0) target = $region105
    $region104: #{_lambda_.1} parent=1 // pred_region
      %1671 = dma.done [#allocation5], 1024
    $region105: #{_lambda_.1} parent=1 // pred_fallthru
      _
    // Predicated region
    $region106: #{_lambda_.1} parent=1 // pred_check
      _
    $region107: #{_lambda_.1} parent=1 // pred_check_branch
      %1673 = sbr.rel (0) target = $region109
    $region108: #{_lambda_.1} parent=1 // pred_region
      %1674 = dma.done [#allocation23], 256
    $region109: #{_lambda_.1} parent=1 // pred_fallthru
      _
    %1675 = vsyncpa [#allocation4], 1
    %1676 = vsyncpa [#allocation7], 1
    %1677 = vsyncpa [#allocation10], 1
    %1678 = vsyncpa [#allocation13], 1
    %1679 = vsyncpa [#allocation16], 1
    %1680 = vsyncpa [#allocation19], 1
    %1681 = vsyncpa [#allocation5], 1
    %1682 = vsyncpa [#allocation23], 1

</llo_original>
